<compile_context>
chip_gen: v5e
topology: v5e:2x2
jax: 0.10.0
libtpu: 0.0.40
codegen_flags: <defaults>
</compile_context>

<pallas_src>
import functools

import jax
import jax.numpy as jnp
from jax.experimental import pallas as pl
from jax.experimental.pallas import tpu as pltpu


def _qnet_kernel(state_ref, action_ref,
                 w1s_ref, w1a_ref, b1_ref,
                 w2_ref, b2_ref,
                 w3_ref, b3_ref,
                 o_ref):
    # fc1 (+ fused concat): two partial matmuls against the split W1, f32 acc.
    sb = state_ref[...].astype(jnp.bfloat16)
    ab = action_ref[...].astype(jnp.bfloat16)
    h1 = jnp.dot(sb, w1s_ref[...], preferred_element_type=jnp.float32)
    h1 = h1 + jnp.dot(ab, w1a_ref[...], preferred_element_type=jnp.float32)
    h1 = jnp.maximum(h1 + b1_ref[...], 0.0)                      # f32 epilogue

    # fc2 + ReLU
    h2 = jnp.dot(h1.astype(jnp.bfloat16), w2_ref[...],
                 preferred_element_type=jnp.float32)
    h2 = jnp.maximum(h2 + b2_ref[...], 0.0)                      # f32 epilogue

    # fc3: contract (1, 256) with (tb, 256) on the 256 axis -> lane-dense (1, tb).
    out = jax.lax.dot_general(
        w3_ref[...], h2.astype(jnp.bfloat16),
        dimension_numbers=(((1,), (1,)), ((), ())),
        preferred_element_type=jnp.float32)
    o_ref[...] = (out + b3_ref[...]).astype(o_ref.dtype)


@functools.partial(jax.jit, static_argnames=("tb",))
def qnetwork_forward(state, action, params, tb=128):
    """state: [B, num_inputs] f32, action: [B, num_actions] f32 -> Q: [B, 1] f32."""
    w1s, w1a, b1, w2, b2, w3, b3 = params
    B = state.shape[0]
    n_in = state.shape[1]
    n_act = action.shape[1]

    # Pad batch to a multiple of the batch tile; padded rows are sliced off below.
    b_pad = pl.cdiv(B, tb) * tb
    if b_pad != B:
        state = jnp.pad(state, ((0, b_pad - B), (0, 0)))
        action = jnp.pad(action, ((0, b_pad - B), (0, 0)))

    grid = (b_pad // tb,)
    resident = lambda i: (0, 0)     # weights/biases: same block every grid step
    in_specs = [
        pl.BlockSpec((tb, n_in), lambda i: (i, 0)),     # state tile
        pl.BlockSpec((tb, n_act), lambda i: (i, 0)),    # action tile
        pl.BlockSpec(w1s.shape, resident),
        pl.BlockSpec(w1a.shape, resident),
        pl.BlockSpec(b1.shape, resident),
        pl.BlockSpec(w2.shape, resident),
        pl.BlockSpec(b2.shape, resident),
        pl.BlockSpec(w3.shape, resident),
        pl.BlockSpec(b3.shape, resident),
    ]
    out_specs = pl.BlockSpec((1, tb), lambda i: (0, i))  # lane-dense output row

    q_row = pl.pallas_call(
        _qnet_kernel,
        out_shape=jax.ShapeDtypeStruct((1, b_pad), jnp.float32),
        grid=grid,
        in_specs=in_specs,
        out_specs=out_specs,
        compiler_params=pltpu.CompilerParams(
            dimension_semantics=("parallel",),   # megacore-shard the batch (v7x)
            vmem_limit_bytes=32 * 1024 * 1024,
        ),
    )(state, action, w1s, w1a, b1, w2, b2, w3, b3)

    return q_row[0, :B].reshape(B, 1)


def init_params(key, num_inputs, num_actions):
    """nn.Linear-style init. W1 is split into state/action blocks; weights bf16."""
    d_in = num_inputs + num_actions
    dims = [(d_in, 512), (512, 256), (256, 1)]
    ws, bs = [], []
    for fan_in, fan_out in dims:
        key, kw, kb = jax.random.split(key, 3)
        bound = 1.0 / jnp.sqrt(float(fan_in))
        # PyTorch weight is (fan_out, fan_in); we store W^T = (fan_in, fan_out).
        ws.append(jax.random.uniform(kw, (fan_in, fan_out), jnp.float32, -bound, bound))
        bs.append(jax.random.uniform(kb, (1, fan_out), jnp.float32, -bound, bound))
    w1, w2, w3 = ws
    b1, b2, b3 = bs
    w1s = w1[:num_inputs].astype(jnp.bfloat16)   # (num_inputs, 512)
    w1a = w1[num_inputs:].astype(jnp.bfloat16)   # (num_actions, 512)
    w2b = w2.astype(jnp.bfloat16)                # (512, 256)
    w3r = w3.T.astype(jnp.bfloat16)              # (1, 256)  fc3 weight as a row
    return (w1s, w1a, b1, w2b, b2, w3r, b3)      # biases stay f32


def reference_forward(state, action, params):
    """Plain-JAX reference with the same bf16-weight / f32-accumulate math."""
    w1s, w1a, b1, w2, b2, w3, b3 = params
    sb = state.astype(jnp.bfloat16)
    ab = action.astype(jnp.bfloat16)
    h1 = (jnp.dot(sb, w1s, preferred_element_type=jnp.float32)
          + jnp.dot(ab, w1a, preferred_element_type=jnp.float32))
    h1 = jnp.maximum(h1 + b1, 0.0)
    h2 = jnp.dot(h1.astype(jnp.bfloat16), w2, preferred_element_type=jnp.float32)
    h2 = jnp.maximum(h2 + b2, 0.0)
    return jnp.dot(h2.astype(jnp.bfloat16), w3.T,
                   preferred_element_type=jnp.float32) + b3


if __name__ == "__main__":
    num_inputs, num_actions, batch = 24, 8, 8

    key = jax.random.PRNGKey(0)
    k_state, k_action, k_params = jax.random.split(key, 3)

    state = jax.random.normal(k_state, (batch, num_inputs), jnp.float32)
    action = jax.random.normal(k_action, (batch, num_actions), jnp.float32)
    params = init_params(k_params, num_inputs, num_actions)

    q = qnetwork_forward(state, action, params)
    q = jax.block_until_ready(q)

    ref = reference_forward(state, action, params)
    assert q.shape == (batch, 1)
    assert jnp.allclose(q, ref, atol=5e-3, rtol=5e-3)

    print("KERNEL_OK")
</pallas_src>

<mosaic_0001>
module attributes {stable_mosaic.version = 11 : i64} {
  func.func @_qnet_kernel(%arg0: i32, %arg1: memref<128x24xf32, #tpu.memory_space<vmem>>, %arg2: memref<128x8xf32, #tpu.memory_space<vmem>>, %arg3: memref<24x512xbf16, #tpu.memory_space<vmem>>, %arg4: memref<8x512xbf16, #tpu.memory_space<vmem>>, %arg5: memref<1x512xf32, #tpu.memory_space<vmem>>, %arg6: memref<512x256xbf16, #tpu.memory_space<vmem>>, %arg7: memref<1x256xf32, #tpu.memory_space<vmem>>, %arg8: memref<1x256xbf16, #tpu.memory_space<vmem>>, %arg9: memref<1x1xf32, #tpu.memory_space<vmem>>, %arg10: memref<1x128xf32, #tpu.memory_space<vmem>>) attributes {dimension_semantics = [#tpu.dimension_semantics<parallel>], iteration_bounds = array<i64: 1>, scalar_prefetch = 0 : i64, scratch_operands = 0 : i64, tpu.core_type = #tpu.core_type<tc>, window_params = [{transform_indices = @transform_0, window_bounds = array<i64: 128, 24>}, {transform_indices = @transform_1, window_bounds = array<i64: 128, 8>}, {pipeline_mode = #tpu.pipeline_mode<synchronous>, transform_indices = @transform_2, window_bounds = array<i64: 24, 512>}, {pipeline_mode = #tpu.pipeline_mode<synchronous>, transform_indices = @transform_3, window_bounds = array<i64: 8, 512>}, {pipeline_mode = #tpu.pipeline_mode<synchronous>, transform_indices = @transform_4, window_bounds = array<i64: 1, 512>}, {pipeline_mode = #tpu.pipeline_mode<synchronous>, transform_indices = @transform_5, window_bounds = array<i64: 512, 256>}, {pipeline_mode = #tpu.pipeline_mode<synchronous>, transform_indices = @transform_6, window_bounds = array<i64: 1, 256>}, {pipeline_mode = #tpu.pipeline_mode<synchronous>, transform_indices = @transform_7, window_bounds = array<i64: 1, 256>}, {pipeline_mode = #tpu.pipeline_mode<synchronous>, transform_indices = @transform_8, window_bounds = array<i64: 1, 1>}, {transform_indices = @transform_9, window_bounds = array<i64: 1, 128>}]} {
    %c0 = arith.constant 0 : index
    %c0_0 = arith.constant 0 : index
    %0 = vector.load %arg1[%c0, %c0_0] : memref<128x24xf32, #tpu.memory_space<vmem>>, vector<128x24xf32>
    %1 = arith.truncf %0 : vector<128x24xf32> to vector<128x24xbf16>
    %c0_1 = arith.constant 0 : index
    %c0_2 = arith.constant 0 : index
    %2 = vector.load %arg2[%c0_1, %c0_2] : memref<128x8xf32, #tpu.memory_space<vmem>>, vector<128x8xf32>
    %3 = arith.truncf %2 : vector<128x8xf32> to vector<128x8xbf16>
    %c0_3 = arith.constant 0 : index
    %c0_4 = arith.constant 0 : index
    %4 = vector.load %arg3[%c0_3, %c0_4] : memref<24x512xbf16, #tpu.memory_space<vmem>>, vector<24x512xbf16>
    %cst = arith.constant dense<0.000000e+00> : vector<128x512xf32>
    %5 = tpu.matmul %1, %4, %cst {dimension_numbers = #tpu.dot_dimension_numbers<[1], [0], [0], [1], [0, 0, 1, 1], [], []>} : vector<128x24xbf16>, vector<24x512xbf16>, vector<128x512xf32> -> vector<128x512xf32>
    %c0_5 = arith.constant 0 : index
    %c0_6 = arith.constant 0 : index
    %6 = vector.load %arg4[%c0_5, %c0_6] : memref<8x512xbf16, #tpu.memory_space<vmem>>, vector<8x512xbf16>
    %cst_7 = arith.constant dense<0.000000e+00> : vector<128x512xf32>
    %7 = tpu.matmul %3, %6, %cst_7 {dimension_numbers = #tpu.dot_dimension_numbers<[1], [0], [0], [1], [0, 0, 1, 1], [], []>} : vector<128x8xbf16>, vector<8x512xbf16>, vector<128x512xf32> -> vector<128x512xf32>
    %8 = arith.addf %5, %7 : vector<128x512xf32>
    %c0_8 = arith.constant 0 : index
    %c0_9 = arith.constant 0 : index
    %9 = vector.load %arg5[%c0_8, %c0_9] : memref<1x512xf32, #tpu.memory_space<vmem>>, vector<1x512xf32>
    %10 = vector.broadcast %9 : vector<1x512xf32> to vector<128x512xf32>
    %11 = arith.addf %8, %10 : vector<128x512xf32>
    %cst_10 = arith.constant 0.000000e+00 : f32
    %12 = vector.broadcast %cst_10 : f32 to vector<128x512xf32>
    %13 = arith.maximumf %11, %12 : vector<128x512xf32>
    %14 = arith.truncf %13 : vector<128x512xf32> to vector<128x512xbf16>
    %c0_11 = arith.constant 0 : index
    %c0_12 = arith.constant 0 : index
    %15 = vector.load %arg6[%c0_11, %c0_12] : memref<512x256xbf16, #tpu.memory_space<vmem>>, vector<512x256xbf16>
    %cst_13 = arith.constant dense<0.000000e+00> : vector<128x256xf32>
    %16 = tpu.matmul %14, %15, %cst_13 {dimension_numbers = #tpu.dot_dimension_numbers<[1], [0], [0], [1], [0, 0, 1, 1], [], []>} : vector<128x512xbf16>, vector<512x256xbf16>, vector<128x256xf32> -> vector<128x256xf32>
    %c0_14 = arith.constant 0 : index
    %c0_15 = arith.constant 0 : index
    %17 = vector.load %arg7[%c0_14, %c0_15] : memref<1x256xf32, #tpu.memory_space<vmem>>, vector<1x256xf32>
    %18 = vector.broadcast %17 : vector<1x256xf32> to vector<128x256xf32>
    %19 = arith.addf %16, %18 : vector<128x256xf32>
    %cst_16 = arith.constant 0.000000e+00 : f32
    %20 = vector.broadcast %cst_16 : f32 to vector<128x256xf32>
    %21 = arith.maximumf %19, %20 : vector<128x256xf32>
    %c0_17 = arith.constant 0 : index
    %c0_18 = arith.constant 0 : index
    %22 = vector.load %arg8[%c0_17, %c0_18] : memref<1x256xbf16, #tpu.memory_space<vmem>>, vector<1x256xbf16>
    %23 = arith.truncf %21 : vector<128x256xf32> to vector<128x256xbf16>
    %cst_19 = arith.constant dense<0.000000e+00> : vector<1x128xf32>
    %24 = tpu.matmul %22, %23, %cst_19 {dimension_numbers = #tpu.dot_dimension_numbers<[1], [1], [0], [0], [0, 0, 1, 0], [], []>} : vector<1x256xbf16>, vector<128x256xbf16>, vector<1x128xf32> -> vector<1x128xf32>
    %c0_20 = arith.constant 0 : index
    %c0_21 = arith.constant 0 : index
    %25 = vector.load %arg9[%c0_20, %c0_21] : memref<1x1xf32, #tpu.memory_space<vmem>>, vector<1x1xf32>
    %26 = vector.broadcast %25 : vector<1x1xf32> to vector<1x128xf32>
    %27 = arith.addf %24, %26 : vector<1x128xf32>
    %c0_22 = arith.constant 0 : index
    %c0_23 = arith.constant 0 : index
    %28 = vector.load %arg10[%c0_22, %c0_23] : memref<1x128xf32, #tpu.memory_space<vmem>>, vector<1x128xf32>
    tpu.vector_store %arg10[%c0_22, %c0_23], %27 {strides = array<i32>} : memref<1x128xf32, #tpu.memory_space<vmem>>, vector<1x128xf32>,
    return
  }
  func.func @transform_0(%arg0: i32) -> (i32, i32) {
    %c0_i32 = arith.constant 0 : i32
    %c0_i32_0 = arith.constant 0 : i32
    return %arg0, %c0_i32 : i32, i32
  }
  func.func @transform_1(%arg0: i32) -> (i32, i32) {
    %c0_i32 = arith.constant 0 : i32
    %c0_i32_0 = arith.constant 0 : i32
    return %arg0, %c0_i32 : i32, i32
  }
  func.func @transform_2(%arg0: i32) -> (i32, i32) {
    %c0_i32 = arith.constant 0 : i32
    %c0_i32_0 = arith.constant 0 : i32
    %c0_i32_1 = arith.constant 0 : i32
    return %c0_i32, %c0_i32_0 : i32, i32
  }
  func.func @transform_3(%arg0: i32) -> (i32, i32) {
    %c0_i32 = arith.constant 0 : i32
    %c0_i32_0 = arith.constant 0 : i32
    %c0_i32_1 = arith.constant 0 : i32
    return %c0_i32, %c0_i32_0 : i32, i32
  }
  func.func @transform_4(%arg0: i32) -> (i32, i32) {
    %c0_i32 = arith.constant 0 : i32
    %c0_i32_0 = arith.constant 0 : i32
    %c0_i32_1 = arith.constant 0 : i32
    return %c0_i32, %c0_i32_0 : i32, i32
  }
  func.func @transform_5(%arg0: i32) -> (i32, i32) {
    %c0_i32 = arith.constant 0 : i32
    %c0_i32_0 = arith.constant 0 : i32
    %c0_i32_1 = arith.constant 0 : i32
    return %c0_i32, %c0_i32_0 : i32, i32
  }
  func.func @transform_6(%arg0: i32) -> (i32, i32) {
    %c0_i32 = arith.constant 0 : i32
    %c0_i32_0 = arith.constant 0 : i32
    %c0_i32_1 = arith.constant 0 : i32
    return %c0_i32, %c0_i32_0 : i32, i32
  }
  func.func @transform_7(%arg0: i32) -> (i32, i32) {
    %c0_i32 = arith.constant 0 : i32
    %c0_i32_0 = arith.constant 0 : i32
    %c0_i32_1 = arith.constant 0 : i32
    return %c0_i32, %c0_i32_0 : i32, i32
  }
  func.func @transform_8(%arg0: i32) -> (i32, i32) {
    %c0_i32 = arith.constant 0 : i32
    %c0_i32_0 = arith.constant 0 : i32
    %c0_i32_1 = arith.constant 0 : i32
    return %c0_i32, %c0_i32_0 : i32, i32
  }
  func.func @transform_9(%arg0: i32) -> (i32, i32) {
    %c0_i32 = arith.constant 0 : i32
    %c0_i32_0 = arith.constant 0 : i32
    return %c0_i32, %arg0 : i32, i32
  }
}

</mosaic_0001>

<llo_original>
// kernel: qnetwork_forward.1
$region0: #{qnetwork_forward.1}
  #allocation0 [shape = 'u32[]', space=smem, size = 0x4, offset = 0x4, fixed_abs, tag = 'smem constant byte address 0x4 - core index']
  #allocation1 [shape = 'u32[72,128]{1,0:T(1,128)}', space=vmem, size = 0x9000, scoped, tag = 'internal scratch']
  #allocation2 [shape = 'f32[1,1]{1,0:T(1,128)S(1)}', space=vmem, size = 0x200, scoped, tag = 'scoped memory for qnetwork_forward.1']
  %s0 = inlined_call_operand.vmem [shape: f32[128,24], index: 0, kind: input, shape index: {}]
  %s1 = inlined_call_operand.vmem [shape: f32[128,8], index: 1, kind: input, shape index: {}]
  %s2 = inlined_call_operand.vmem [shape: bf16[24,512], index: 2, kind: input, shape index: {}]
  %s3 = inlined_call_operand.vmem [shape: bf16[8,512], index: 3, kind: input, shape index: {}]
  %s4 = inlined_call_operand.vmem [shape: f32[1,512], index: 4, kind: input, shape index: {}]
  %s5 = inlined_call_operand.hbm [shape: bf16[512,256], index: 5, kind: input, shape index: {}]
  %s6 = inlined_call_operand.vmem [shape: f32[1,256], index: 6, kind: input, shape index: {}]
  %s7 = inlined_call_operand.vmem [shape: bf16[1,256], index: 7, kind: input, shape index: {}]
  %s8 = inlined_call_operand.<no memory space> [shape: f32[1,1], index: 8, kind: input, shape index: {}]
  %s9 = inlined_call_operand.vmem [shape: f32[1,128], index: 9, kind: output, shape index: {}]
  %s10 = sld [smem:[#allocation0]]
  $region50: #{qnetwork_forward.1} parent=0
    _
  %s12 = ssub.s32 1, %s10
  %s13 = scalar_select 0, %s12, %s10
  %v14 = vstv %s8
  %15 = vst [vmem:[#allocation2] sm:$0x1] %v14
  $region1: #{qnetwork_forward.1} parent=0
    #allocation3 [shape = 'u8[262144]{0}', space=vmem, size = 0x40000, scoped, tag = 'input window, operand 5, single buffered']
    #allocation4 [shape = 's32[1]{0}', space=sflag, size = 0x4, scoped, tag = 'scoped memory for qnetwork_forward.1']
    %16 = vsyncpa [#allocation4], 0
    // Predicated region
    $region2: #{qnetwork_forward.1} parent=1 // pred_check
      _
    $region3: #{qnetwork_forward.1} parent=1 // pred_check_branch
      %18 = sbr.rel (0) target = $region5
    $region4: #{qnetwork_forward.1} parent=1 // pred_region
      _
    $region5: #{qnetwork_forward.1} parent=1 // pred_fallthru
      _
    // Predicated region
    $region6: #{qnetwork_forward.1} parent=1 // pred_check
      _
    $region7: #{qnetwork_forward.1} parent=1 // pred_check_branch
      %20 = sbr.rel (0) target = $region9
    $region8: #{qnetwork_forward.1} parent=1 // pred_region
      _
    $region9: #{qnetwork_forward.1} parent=1 // pred_fallthru
      _
    // Predicated region
    $region10: #{qnetwork_forward.1} parent=1 // pred_check
      _
    $region11: #{qnetwork_forward.1} parent=1 // pred_check_branch
      %22 = sbr.rel (0) target = $region13
    $region12: #{qnetwork_forward.1} parent=1 // pred_region
      _
    $region13: #{qnetwork_forward.1} parent=1 // pred_fallthru
      _
    // Predicated region
    $region14: #{qnetwork_forward.1} parent=1 // pred_check
      _
    $region15: #{qnetwork_forward.1} parent=1 // pred_check_branch
      %24 = sbr.rel (0) target = $region17
    $region16: #{qnetwork_forward.1} parent=1 // pred_region
      _
    $region17: #{qnetwork_forward.1} parent=1 // pred_fallthru
      _
    // Predicated region
    $region18: #{qnetwork_forward.1} parent=1 // pred_check
      _
    $region19: #{qnetwork_forward.1} parent=1 // pred_check_branch
      %26 = sbr.rel (0) target = $region21
    $region20: #{qnetwork_forward.1} parent=1 // pred_region
      _
    $region21: #{qnetwork_forward.1} parent=1 // pred_fallthru
      _
    // Predicated region
    $region22: #{qnetwork_forward.1} parent=1 // pred_check
      _
    $region23: #{qnetwork_forward.1} parent=1 // pred_check_branch
      %28 = sbr.rel (0) target = $region25
    $region24: #{qnetwork_forward.1} parent=1 // pred_region
      %30 = vsyncadd [#allocation4], 0
      %s31 = sshll.u32 %s5, 4
      %s32 = int_to_ptr.hbm [resolvable:$true] %s31
      %s33 = sshll.u32 [#allocation3], 4
      %s34 = int_to_ptr.vmem [resolvable:$true] %s33
      %39 = dma.hbm_to_vmem [thread:$0]  %s32, 8192, %s34, [#allocation4], 128, 128, 8
    $region25: #{qnetwork_forward.1} parent=1 // pred_fallthru
      _
    // Predicated region
    $region26: #{qnetwork_forward.1} parent=1 // pred_check
      _
    $region27: #{qnetwork_forward.1} parent=1 // pred_check_branch
      %41 = sbr.rel (0) target = $region29
    $region28: #{qnetwork_forward.1} parent=1 // pred_region
      _
    $region29: #{qnetwork_forward.1} parent=1 // pred_fallthru
      _
    // Predicated region
    $region30: #{qnetwork_forward.1} parent=1 // pred_check
      _
    $region31: #{qnetwork_forward.1} parent=1 // pred_check_branch
      %43 = sbr.rel (0) target = $region33
    $region32: #{qnetwork_forward.1} parent=1 // pred_region
      _
    $region33: #{qnetwork_forward.1} parent=1 // pred_fallthru
      _
    // Predicated region
    $region34: #{qnetwork_forward.1} parent=1 // pred_check
      _
    $region35: #{qnetwork_forward.1} parent=1 // pred_check_branch
      %45 = sbr.rel (0) target = $region37
    $region36: #{qnetwork_forward.1} parent=1 // pred_region
      _
    $region37: #{qnetwork_forward.1} parent=1 // pred_fallthru
      _
    // Predicated region
    $region38: #{qnetwork_forward.1} parent=1 // pred_check
      _
    $region39: #{qnetwork_forward.1} parent=1 // pred_check_branch
      %47 = sbr.rel (0) target = $region41
    $region40: #{qnetwork_forward.1} parent=1 // pred_region
      %49 = dma.done [#allocation4], 8192
    $region41: #{qnetwork_forward.1} parent=1 // pred_fallthru
      _
    %v51 = vld [vmem:[%s0] sm:$0xff]
    %v52 = vld [vmem:[%s0 + $0x8] sm:$0xff]
    %v53 = vld [vmem:[%s0 + $0x10] sm:$0xff]
    %v54 = vld [vmem:[%s0 + $0x18] sm:$0xff]
    %v55 = vld [vmem:[%s0 + $0x20] sm:$0xff]
    %v56 = vld [vmem:[%s0 + $0x28] sm:$0xff]
    %v57 = vld [vmem:[%s0 + $0x30] sm:$0xff]
    %v58 = vld [vmem:[%s0 + $0x38] sm:$0xff]
    %v59 = vld [vmem:[%s0 + $0x40] sm:$0xff]
    %v60 = vld [vmem:[%s0 + $0x48] sm:$0xff]
    %v61 = vld [vmem:[%s0 + $0x50] sm:$0xff]
    %v62 = vld [vmem:[%s0 + $0x58] sm:$0xff]
    %v63 = vld [vmem:[%s0 + $0x60] sm:$0xff]
    %v64 = vld [vmem:[%s0 + $0x68] sm:$0xff]
    %v65 = vld [vmem:[%s0 + $0x70] sm:$0xff]
    %v66 = vld [vmem:[%s0 + $0x78] sm:$0xff]
    %v67 = vpack.c.bf16 %v52, %v51
    %v68 = vpack.c.bf16 %v54, %v53
    %v69 = vpack.c.bf16 %v56, %v55
    %v70 = vpack.c.bf16 %v58, %v57
    %v71 = vpack.c.bf16 %v60, %v59
    %v72 = vpack.c.bf16 %v62, %v61
    %v73 = vpack.c.bf16 %v64, %v63
    %v74 = vpack.c.bf16 %v66, %v65
    %v75 = vld [vmem:[%s1] sm:$0xff]
    %v76 = vld [vmem:[%s1 + $0x8] sm:$0xff]
    %v77 = vld [vmem:[%s1 + $0x10] sm:$0xff]
    %v78 = vld [vmem:[%s1 + $0x18] sm:$0xff]
    %v79 = vld [vmem:[%s1 + $0x20] sm:$0xff]
    %v80 = vld [vmem:[%s1 + $0x28] sm:$0xff]
    %v81 = vld [vmem:[%s1 + $0x30] sm:$0xff]
    %v82 = vld [vmem:[%s1 + $0x38] sm:$0xff]
    %v83 = vld [vmem:[%s1 + $0x40] sm:$0xff]
    %v84 = vld [vmem:[%s1 + $0x48] sm:$0xff]
    %v85 = vld [vmem:[%s1 + $0x50] sm:$0xff]
    %v86 = vld [vmem:[%s1 + $0x58] sm:$0xff]
    %v87 = vld [vmem:[%s1 + $0x60] sm:$0xff]
    %v88 = vld [vmem:[%s1 + $0x68] sm:$0xff]
    %v89 = vld [vmem:[%s1 + $0x70] sm:$0xff]
    %v90 = vld [vmem:[%s1 + $0x78] sm:$0xff]
    %v91 = vpack.c.bf16 %v76, %v75
    %v92 = vpack.c.bf16 %v78, %v77
    %v93 = vpack.c.bf16 %v80, %v79
    %v94 = vpack.c.bf16 %v82, %v81
    %v95 = vpack.c.bf16 %v84, %v83
    %v96 = vpack.c.bf16 %v86, %v85
    %v97 = vpack.c.bf16 %v88, %v87
    %v98 = vpack.c.bf16 %v90, %v89
    %v99 = vld [vmem:[%s2] sm:$0xff]
    %v100 = vld [vmem:[%s2 + $0x8] sm:$0xff]
    %v101 = vld [vmem:[%s2 + $0x10] sm:$0xff]
    %v102 = vld [vmem:[%s2 + $0x18] sm:$0xff]
    %v103 = vld [vmem:[%s2 + $0x20] sm:$0xff]
    %v104 = vld [vmem:[%s2 + $0x28] sm:$0xff]
    %v105 = vld [vmem:[%s3] sm:$0xff]
    %v106 = vld [vmem:[%s3 + $0x8] sm:$0xff]
    %v109 = vunpack.c.l.b16 %v105
    %v110 = vunpack.c.h.b16 %v105
    %v111 = vunpack.c.l.b16 %v106
    %v112 = vunpack.c.h.b16 %v106
    %v113 = vpack.c.b16 %v109, %v109
    %v114 = vpack.c.b16 %v110, %v110
    %v115 = vpack.c.b16 %v111, %v111
    %v116 = vpack.c.b16 %v112, %v112
    %vm117 = vcmask 64512
    %v119 = vsel %vm117, %v91, 0
    %v122 = vsel %vm117, %v92, 0
    %v125 = vsel %vm117, %v93, 0
    %v128 = vsel %vm117, %v94, 0
    %v131 = vsel %vm117, %v95, 0
    %v134 = vsel %vm117, %v96, 0
    %v137 = vsel %vm117, %v97, 0
    %v140 = vsel %vm117, %v98, 0
    %vm142 = vcmask 1043456
    %v144 = vsel %vm142, %v113, 0
    %v147 = vsel %vm142, %v114, 0
    %v150 = vsel %vm142, %v115, 0
    %v153 = vsel %vm142, %v116, 0
    %155 = vmatpush.bf16.msra.mxu0 0
    %156 = vmatpush.bf16.msra.mxu0 0
    %157 = vmatpush.bf16.msra.mxu0 0
    %158 = vmatpush.bf16.msra.mxu0 0
    %159 = vmatpush.bf16.msra.mxu0 0
    %160 = vmatpush.bf16.msra.mxu0 0
    %161 = vmatpush.bf16.msra.mxu0 0
    %162 = vmatpush.bf16.msra.mxu0 %v144
    %163 = vmatmul.bf16.gmra.mxu0 %v119
    %v164 = vpop.f32.mrf.mxu0
    %v165 = vadd.f32 0.0, %v164
    %v166 = vpop.f32.mrf.mxu0
    %v167 = vadd.f32 0.0, %v166
    %168 = vmatmul.bf16.gmra.mxu0 %v122
    %v169 = vpop.f32.mrf.mxu0
    %v170 = vadd.f32 0.0, %v169
    %v171 = vpop.f32.mrf.mxu0
    %v172 = vadd.f32 0.0, %v171
    %173 = vmatmul.bf16.gmra.mxu0 %v125
    %v174 = vpop.f32.mrf.mxu0
    %v175 = vadd.f32 0.0, %v174
    %v176 = vpop.f32.mrf.mxu0
    %v177 = vadd.f32 0.0, %v176
    %178 = vmatmul.bf16.gmra.mxu0 %v128
    %v179 = vpop.f32.mrf.mxu0
    %v180 = vadd.f32 0.0, %v179
    %v181 = vpop.f32.mrf.mxu0
    %v182 = vadd.f32 0.0, %v181
    %183 = vmatmul.bf16.gmra.mxu0 %v131
    %v184 = vpop.f32.mrf.mxu0
    %v185 = vadd.f32 0.0, %v184
    %v186 = vpop.f32.mrf.mxu0
    %v187 = vadd.f32 0.0, %v186
    %188 = vmatmul.bf16.gmra.mxu0 %v134
    %v189 = vpop.f32.mrf.mxu0
    %v190 = vadd.f32 0.0, %v189
    %v191 = vpop.f32.mrf.mxu0
    %v192 = vadd.f32 0.0, %v191
    %193 = vmatmul.bf16.gmra.mxu0 %v137
    %v194 = vpop.f32.mrf.mxu0
    %v195 = vadd.f32 0.0, %v194
    %v196 = vpop.f32.mrf.mxu0
    %v197 = vadd.f32 0.0, %v196
    %198 = vmatmul.bf16.gmra.mxu0 %v140
    %v199 = vpop.f32.mrf.mxu0
    %v200 = vadd.f32 0.0, %v199
    %v201 = vpop.f32.mrf.mxu0
    %v202 = vadd.f32 0.0, %v201
    %203 = vdwg.mxu0
    %204 = vmatpush.bf16.msra.mxu0 0
    %205 = vmatpush.bf16.msra.mxu0 0
    %206 = vmatpush.bf16.msra.mxu0 0
    %207 = vmatpush.bf16.msra.mxu0 0
    %208 = vmatpush.bf16.msra.mxu0 0
    %209 = vmatpush.bf16.msra.mxu0 0
    %210 = vmatpush.bf16.msra.mxu0 0
    %211 = vmatpush.bf16.msra.mxu0 %v147
    %212 = vmatmul.bf16.gmra.mxu0 %v119
    %v213 = vpop.f32.mrf.mxu0
    %v214 = vadd.f32 0.0, %v213
    %v215 = vpop.f32.mrf.mxu0
    %v216 = vadd.f32 0.0, %v215
    %217 = vmatmul.bf16.gmra.mxu0 %v122
    %v218 = vpop.f32.mrf.mxu0
    %v219 = vadd.f32 0.0, %v218
    %v220 = vpop.f32.mrf.mxu0
    %v221 = vadd.f32 0.0, %v220
    %222 = vmatmul.bf16.gmra.mxu0 %v125
    %v223 = vpop.f32.mrf.mxu0
    %v224 = vadd.f32 0.0, %v223
    %v225 = vpop.f32.mrf.mxu0
    %v226 = vadd.f32 0.0, %v225
    %227 = vmatmul.bf16.gmra.mxu0 %v128
    %v228 = vpop.f32.mrf.mxu0
    %v229 = vadd.f32 0.0, %v228
    %v230 = vpop.f32.mrf.mxu0
    %v231 = vadd.f32 0.0, %v230
    %232 = vmatmul.bf16.gmra.mxu0 %v131
    %v233 = vpop.f32.mrf.mxu0
    %v234 = vadd.f32 0.0, %v233
    %v235 = vpop.f32.mrf.mxu0
    %v236 = vadd.f32 0.0, %v235
    %237 = vmatmul.bf16.gmra.mxu0 %v134
    %v238 = vpop.f32.mrf.mxu0
    %v239 = vadd.f32 0.0, %v238
    %v240 = vpop.f32.mrf.mxu0
    %v241 = vadd.f32 0.0, %v240
    %242 = vmatmul.bf16.gmra.mxu0 %v137
    %v243 = vpop.f32.mrf.mxu0
    %v244 = vadd.f32 0.0, %v243
    %v245 = vpop.f32.mrf.mxu0
    %v246 = vadd.f32 0.0, %v245
    %247 = vmatmul.bf16.gmra.mxu0 %v140
    %v248 = vpop.f32.mrf.mxu0
    %v249 = vadd.f32 0.0, %v248
    %v250 = vpop.f32.mrf.mxu0
    %v251 = vadd.f32 0.0, %v250
    %252 = vdwg.mxu0
    %253 = vmatpush.bf16.msra.mxu0 0
    %254 = vmatpush.bf16.msra.mxu0 0
    %255 = vmatpush.bf16.msra.mxu0 0
    %256 = vmatpush.bf16.msra.mxu0 0
    %257 = vmatpush.bf16.msra.mxu0 0
    %258 = vmatpush.bf16.msra.mxu0 0
    %259 = vmatpush.bf16.msra.mxu0 0
    %260 = vmatpush.bf16.msra.mxu0 %v150
    %261 = vmatmul.bf16.gmra.mxu0 %v119
    %v262 = vpop.f32.mrf.mxu0
    %v263 = vadd.f32 0.0, %v262
    %v264 = vpop.f32.mrf.mxu0
    %v265 = vadd.f32 0.0, %v264
    %266 = vmatmul.bf16.gmra.mxu0 %v122
    %v267 = vpop.f32.mrf.mxu0
    %v268 = vadd.f32 0.0, %v267
    %v269 = vpop.f32.mrf.mxu0
    %v270 = vadd.f32 0.0, %v269
    %271 = vmatmul.bf16.gmra.mxu0 %v125
    %v272 = vpop.f32.mrf.mxu0
    %v273 = vadd.f32 0.0, %v272
    %v274 = vpop.f32.mrf.mxu0
    %v275 = vadd.f32 0.0, %v274
    %276 = vmatmul.bf16.gmra.mxu0 %v128
    %v277 = vpop.f32.mrf.mxu0
    %v278 = vadd.f32 0.0, %v277
    %v279 = vpop.f32.mrf.mxu0
    %v280 = vadd.f32 0.0, %v279
    %281 = vmatmul.bf16.gmra.mxu0 %v131
    %v282 = vpop.f32.mrf.mxu0
    %v283 = vadd.f32 0.0, %v282
    %v284 = vpop.f32.mrf.mxu0
    %v285 = vadd.f32 0.0, %v284
    %286 = vmatmul.bf16.gmra.mxu0 %v134
    %v287 = vpop.f32.mrf.mxu0
    %v288 = vadd.f32 0.0, %v287
    %v289 = vpop.f32.mrf.mxu0
    %v290 = vadd.f32 0.0, %v289
    %291 = vmatmul.bf16.gmra.mxu0 %v137
    %v292 = vpop.f32.mrf.mxu0
    %v293 = vadd.f32 0.0, %v292
    %v294 = vpop.f32.mrf.mxu0
    %v295 = vadd.f32 0.0, %v294
    %296 = vmatmul.bf16.gmra.mxu0 %v140
    %v297 = vpop.f32.mrf.mxu0
    %v298 = vadd.f32 0.0, %v297
    %v299 = vpop.f32.mrf.mxu0
    %v300 = vadd.f32 0.0, %v299
    %301 = vdwg.mxu0
    %302 = vmatpush.bf16.msra.mxu0 0
    %303 = vmatpush.bf16.msra.mxu0 0
    %304 = vmatpush.bf16.msra.mxu0 0
    %305 = vmatpush.bf16.msra.mxu0 0
    %306 = vmatpush.bf16.msra.mxu0 0
    %307 = vmatpush.bf16.msra.mxu0 0
    %308 = vmatpush.bf16.msra.mxu0 0
    %309 = vmatpush.bf16.msra.mxu0 %v153
    %310 = vmatmul.bf16.gmra.mxu0 %v119
    %v311 = vpop.f32.mrf.mxu0
    %v312 = vadd.f32 0.0, %v311
    %v313 = vpop.f32.mrf.mxu0
    %v314 = vadd.f32 0.0, %v313
    %315 = vmatmul.bf16.gmra.mxu0 %v122
    %v316 = vpop.f32.mrf.mxu0
    %v317 = vadd.f32 0.0, %v316
    %v318 = vpop.f32.mrf.mxu0
    %v319 = vadd.f32 0.0, %v318
    %320 = vmatmul.bf16.gmra.mxu0 %v125
    %v321 = vpop.f32.mrf.mxu0
    %v322 = vadd.f32 0.0, %v321
    %v323 = vpop.f32.mrf.mxu0
    %v324 = vadd.f32 0.0, %v323
    %325 = vmatmul.bf16.gmra.mxu0 %v128
    %v326 = vpop.f32.mrf.mxu0
    %v327 = vadd.f32 0.0, %v326
    %v328 = vpop.f32.mrf.mxu0
    %v329 = vadd.f32 0.0, %v328
    %330 = vmatmul.bf16.gmra.mxu0 %v131
    %v331 = vpop.f32.mrf.mxu0
    %v332 = vadd.f32 0.0, %v331
    %v333 = vpop.f32.mrf.mxu0
    %v334 = vadd.f32 0.0, %v333
    %335 = vmatmul.bf16.gmra.mxu0 %v134
    %v336 = vpop.f32.mrf.mxu0
    %v337 = vadd.f32 0.0, %v336
    %v338 = vpop.f32.mrf.mxu0
    %v339 = vadd.f32 0.0, %v338
    %340 = vmatmul.bf16.gmra.mxu0 %v137
    %v341 = vpop.f32.mrf.mxu0
    %v342 = vadd.f32 0.0, %v341
    %v343 = vpop.f32.mrf.mxu0
    %v344 = vadd.f32 0.0, %v343
    %345 = vmatmul.bf16.gmra.mxu0 %v140
    %v346 = vpop.f32.mrf.mxu0
    %v347 = vadd.f32 0.0, %v346
    %v348 = vpop.f32.mrf.mxu0
    %v349 = vadd.f32 0.0, %v348
    %350 = vdwg.mxu0
    %v357 = vunpack.c.l.b16 %v99
    %v358 = vunpack.c.h.b16 %v99
    %v359 = vunpack.c.l.b16 %v100
    %v360 = vunpack.c.h.b16 %v100
    %v361 = vunpack.c.l.b16 %v101
    %v362 = vunpack.c.h.b16 %v101
    %v363 = vunpack.c.l.b16 %v102
    %v364 = vunpack.c.h.b16 %v102
    %v365 = vunpack.c.l.b16 %v103
    %v366 = vunpack.c.h.b16 %v103
    %v367 = vunpack.c.l.b16 %v104
    %v368 = vunpack.c.h.b16 %v104
    %v369 = vpack.c.b16 %v361, %v357
    %v370 = vpack.c.b16 %v362, %v358
    %v371 = vpack.c.b16 %v363, %v359
    %v372 = vpack.c.b16 %v364, %v360
    %v373 = vpack.c.b16 %v365, %v365
    %v374 = vpack.c.b16 %v366, %v366
    %v375 = vpack.c.b16 %v367, %v367
    %v376 = vpack.c.b16 %v368, %v368
    %vm381 = vcmask 195584
    %v383 = vsel %vm381, %v67, 0
    %v386 = vsel %vm381, %v68, 0
    %v389 = vsel %vm381, %v69, 0
    %v392 = vsel %vm381, %v70, 0
    %v395 = vsel %vm381, %v71, 0
    %v398 = vsel %vm381, %v72, 0
    %v401 = vsel %vm381, %v73, 0
    %v404 = vsel %vm381, %v74, 0
    %v407 = vsel %vm142, %v373, 0
    %v410 = vsel %vm142, %v374, 0
    %v413 = vsel %vm142, %v375, 0
    %v416 = vsel %vm142, %v376, 0
    %418 = vmatpush.bf16.msra.mxu0 0
    %419 = vmatpush.bf16.msra.mxu0 0
    %420 = vmatpush.bf16.msra.mxu0 0
    %421 = vmatpush.bf16.msra.mxu0 0
    %422 = vmatpush.bf16.msra.mxu0 0
    %423 = vmatpush.bf16.msra.mxu0 0
    %424 = vmatpush.bf16.msra.mxu0 %v407
    %425 = vmatpush.bf16.msra.mxu0 %v369
    %426 = vmatmul.bf16.gmra.mxu0 %v383
    %v427 = vpop.f32.mrf.mxu0
    %v428 = vadd.f32 %v165, %v427
    %v429 = vpop.f32.mrf.mxu0
    %v430 = vadd.f32 %v167, %v429
    %431 = vmatmul.bf16.gmra.mxu0 %v386
    %v432 = vpop.f32.mrf.mxu0
    %v433 = vadd.f32 %v170, %v432
    %v434 = vpop.f32.mrf.mxu0
    %v435 = vadd.f32 %v172, %v434
    %436 = vmatmul.bf16.gmra.mxu0 %v389
    %v437 = vpop.f32.mrf.mxu0
    %v438 = vadd.f32 %v175, %v437
    %v439 = vpop.f32.mrf.mxu0
    %v440 = vadd.f32 %v177, %v439
    %441 = vmatmul.bf16.gmra.mxu0 %v392
    %v442 = vpop.f32.mrf.mxu0
    %v443 = vadd.f32 %v180, %v442
    %v444 = vpop.f32.mrf.mxu0
    %v445 = vadd.f32 %v182, %v444
    %446 = vmatmul.bf16.gmra.mxu0 %v395
    %v447 = vpop.f32.mrf.mxu0
    %v448 = vadd.f32 %v185, %v447
    %v449 = vpop.f32.mrf.mxu0
    %v450 = vadd.f32 %v187, %v449
    %451 = vmatmul.bf16.gmra.mxu0 %v398
    %v452 = vpop.f32.mrf.mxu0
    %v453 = vadd.f32 %v190, %v452
    %v454 = vpop.f32.mrf.mxu0
    %v455 = vadd.f32 %v192, %v454
    %456 = vmatmul.bf16.gmra.mxu0 %v401
    %v457 = vpop.f32.mrf.mxu0
    %v458 = vadd.f32 %v195, %v457
    %v459 = vpop.f32.mrf.mxu0
    %v460 = vadd.f32 %v197, %v459
    %461 = vmatmul.bf16.gmra.mxu0 %v404
    %v462 = vpop.f32.mrf.mxu0
    %v463 = vadd.f32 %v200, %v462
    %v464 = vpop.f32.mrf.mxu0
    %v465 = vadd.f32 %v202, %v464
    %466 = vdwg.mxu0
    %467 = vmatpush.bf16.msra.mxu0 0
    %468 = vmatpush.bf16.msra.mxu0 0
    %469 = vmatpush.bf16.msra.mxu0 0
    %470 = vmatpush.bf16.msra.mxu0 0
    %471 = vmatpush.bf16.msra.mxu0 0
    %472 = vmatpush.bf16.msra.mxu0 0
    %473 = vmatpush.bf16.msra.mxu0 %v410
    %474 = vmatpush.bf16.msra.mxu0 %v370
    %475 = vmatmul.bf16.gmra.mxu0 %v383
    %v476 = vpop.f32.mrf.mxu0
    %v477 = vadd.f32 %v214, %v476
    %v478 = vpop.f32.mrf.mxu0
    %v479 = vadd.f32 %v216, %v478
    %480 = vmatmul.bf16.gmra.mxu0 %v386
    %v481 = vpop.f32.mrf.mxu0
    %v482 = vadd.f32 %v219, %v481
    %v483 = vpop.f32.mrf.mxu0
    %v484 = vadd.f32 %v221, %v483
    %485 = vmatmul.bf16.gmra.mxu0 %v389
    %v486 = vpop.f32.mrf.mxu0
    %v487 = vadd.f32 %v224, %v486
    %v488 = vpop.f32.mrf.mxu0
    %v489 = vadd.f32 %v226, %v488
    %490 = vmatmul.bf16.gmra.mxu0 %v392
    %v491 = vpop.f32.mrf.mxu0
    %v492 = vadd.f32 %v229, %v491
    %v493 = vpop.f32.mrf.mxu0
    %v494 = vadd.f32 %v231, %v493
    %495 = vmatmul.bf16.gmra.mxu0 %v395
    %v496 = vpop.f32.mrf.mxu0
    %v497 = vadd.f32 %v234, %v496
    %v498 = vpop.f32.mrf.mxu0
    %v499 = vadd.f32 %v236, %v498
    %500 = vmatmul.bf16.gmra.mxu0 %v398
    %v501 = vpop.f32.mrf.mxu0
    %v502 = vadd.f32 %v239, %v501
    %v503 = vpop.f32.mrf.mxu0
    %v504 = vadd.f32 %v241, %v503
    %505 = vmatmul.bf16.gmra.mxu0 %v401
    %v506 = vpop.f32.mrf.mxu0
    %v507 = vadd.f32 %v244, %v506
    %v508 = vpop.f32.mrf.mxu0
    %v509 = vadd.f32 %v246, %v508
    %510 = vmatmul.bf16.gmra.mxu0 %v404
    %v511 = vpop.f32.mrf.mxu0
    %v512 = vadd.f32 %v249, %v511
    %v513 = vpop.f32.mrf.mxu0
    %v514 = vadd.f32 %v251, %v513
    %515 = vdwg.mxu0
    %516 = vmatpush.bf16.msra.mxu0 0
    %517 = vmatpush.bf16.msra.mxu0 0
    %518 = vmatpush.bf16.msra.mxu0 0
    %519 = vmatpush.bf16.msra.mxu0 0
    %520 = vmatpush.bf16.msra.mxu0 0
    %521 = vmatpush.bf16.msra.mxu0 0
    %522 = vmatpush.bf16.msra.mxu0 %v413
    %523 = vmatpush.bf16.msra.mxu0 %v371
    %524 = vmatmul.bf16.gmra.mxu0 %v383
    %v525 = vpop.f32.mrf.mxu0
    %v526 = vadd.f32 %v263, %v525
    %v527 = vpop.f32.mrf.mxu0
    %v528 = vadd.f32 %v265, %v527
    %529 = vmatmul.bf16.gmra.mxu0 %v386
    %v530 = vpop.f32.mrf.mxu0
    %v531 = vadd.f32 %v268, %v530
    %v532 = vpop.f32.mrf.mxu0
    %v533 = vadd.f32 %v270, %v532
    %534 = vmatmul.bf16.gmra.mxu0 %v389
    %v535 = vpop.f32.mrf.mxu0
    %v536 = vadd.f32 %v273, %v535
    %v537 = vpop.f32.mrf.mxu0
    %v538 = vadd.f32 %v275, %v537
    %539 = vmatmul.bf16.gmra.mxu0 %v392
    %v540 = vpop.f32.mrf.mxu0
    %v541 = vadd.f32 %v278, %v540
    %v542 = vpop.f32.mrf.mxu0
    %v543 = vadd.f32 %v280, %v542
    %544 = vmatmul.bf16.gmra.mxu0 %v395
    %v545 = vpop.f32.mrf.mxu0
    %v546 = vadd.f32 %v283, %v545
    %v547 = vpop.f32.mrf.mxu0
    %v548 = vadd.f32 %v285, %v547
    %549 = vmatmul.bf16.gmra.mxu0 %v398
    %v550 = vpop.f32.mrf.mxu0
    %v551 = vadd.f32 %v288, %v550
    %v552 = vpop.f32.mrf.mxu0
    %v553 = vadd.f32 %v290, %v552
    %554 = vmatmul.bf16.gmra.mxu0 %v401
    %v555 = vpop.f32.mrf.mxu0
    %v556 = vadd.f32 %v293, %v555
    %v557 = vpop.f32.mrf.mxu0
    %v558 = vadd.f32 %v295, %v557
    %559 = vmatmul.bf16.gmra.mxu0 %v404
    %v560 = vpop.f32.mrf.mxu0
    %v561 = vadd.f32 %v298, %v560
    %v562 = vpop.f32.mrf.mxu0
    %v563 = vadd.f32 %v300, %v562
    %564 = vdwg.mxu0
    %565 = vmatpush.bf16.msra.mxu0 0
    %566 = vmatpush.bf16.msra.mxu0 0
    %567 = vmatpush.bf16.msra.mxu0 0
    %568 = vmatpush.bf16.msra.mxu0 0
    %569 = vmatpush.bf16.msra.mxu0 0
    %570 = vmatpush.bf16.msra.mxu0 0
    %571 = vmatpush.bf16.msra.mxu0 %v416
    %572 = vmatpush.bf16.msra.mxu0 %v372
    %573 = vmatmul.bf16.gmra.mxu0 %v383
    %v574 = vpop.f32.mrf.mxu0
    %v575 = vadd.f32 %v312, %v574
    %v576 = vpop.f32.mrf.mxu0
    %v577 = vadd.f32 %v314, %v576
    %578 = vmatmul.bf16.gmra.mxu0 %v386
    %v579 = vpop.f32.mrf.mxu0
    %v580 = vadd.f32 %v317, %v579
    %v581 = vpop.f32.mrf.mxu0
    %v582 = vadd.f32 %v319, %v581
    %583 = vmatmul.bf16.gmra.mxu0 %v389
    %v584 = vpop.f32.mrf.mxu0
    %v585 = vadd.f32 %v322, %v584
    %v586 = vpop.f32.mrf.mxu0
    %v587 = vadd.f32 %v324, %v586
    %588 = vmatmul.bf16.gmra.mxu0 %v392
    %v589 = vpop.f32.mrf.mxu0
    %v590 = vadd.f32 %v327, %v589
    %v591 = vpop.f32.mrf.mxu0
    %v592 = vadd.f32 %v329, %v591
    %593 = vmatmul.bf16.gmra.mxu0 %v395
    %v594 = vpop.f32.mrf.mxu0
    %v595 = vadd.f32 %v332, %v594
    %v596 = vpop.f32.mrf.mxu0
    %v597 = vadd.f32 %v334, %v596
    %598 = vmatmul.bf16.gmra.mxu0 %v398
    %v599 = vpop.f32.mrf.mxu0
    %v600 = vadd.f32 %v337, %v599
    %v601 = vpop.f32.mrf.mxu0
    %v602 = vadd.f32 %v339, %v601
    %603 = vmatmul.bf16.gmra.mxu0 %v401
    %v604 = vpop.f32.mrf.mxu0
    %v605 = vadd.f32 %v342, %v604
    %v606 = vpop.f32.mrf.mxu0
    %v607 = vadd.f32 %v344, %v606
    %608 = vmatmul.bf16.gmra.mxu0 %v404
    %v609 = vpop.f32.mrf.mxu0
    %v610 = vadd.f32 %v347, %v609
    %v611 = vpop.f32.mrf.mxu0
    %v612 = vadd.f32 %v349, %v611
    %613 = vdwg.mxu0
    %v614 = vld [vmem:[%s4] sm:$0xf]
    %v616 = vperm.slane %v614, 0
    %v617 = vperm.slane %v614, 1
    %v618 = vperm.slane %v614, 2
    %v619 = vperm.slane %v614, 3
    %v624 = vadd.f32 %v428, %v616
    %v625 = vadd.f32 %v477, %v617
    %v626 = vadd.f32 %v526, %v618
    %v627 = vadd.f32 %v575, %v619
    %v628 = vadd.f32 %v430, %v616
    %v629 = vadd.f32 %v479, %v617
    %v630 = vadd.f32 %v528, %v618
    %v631 = vadd.f32 %v577, %v619
    %v632 = vadd.f32 %v433, %v616
    %v633 = vadd.f32 %v482, %v617
    %v634 = vadd.f32 %v531, %v618
    %v635 = vadd.f32 %v580, %v619
    %v636 = vadd.f32 %v435, %v616
    %v637 = vadd.f32 %v484, %v617
    %v638 = vadd.f32 %v533, %v618
    %v639 = vadd.f32 %v582, %v619
    %v640 = vadd.f32 %v438, %v616
    %v641 = vadd.f32 %v487, %v617
    %v642 = vadd.f32 %v536, %v618
    %v643 = vadd.f32 %v585, %v619
    %v644 = vadd.f32 %v440, %v616
    %v645 = vadd.f32 %v489, %v617
    %v646 = vadd.f32 %v538, %v618
    %v647 = vadd.f32 %v587, %v619
    %v648 = vadd.f32 %v443, %v616
    %v649 = vadd.f32 %v492, %v617
    %v650 = vadd.f32 %v541, %v618
    %v651 = vadd.f32 %v590, %v619
    %v652 = vadd.f32 %v445, %v616
    %v653 = vadd.f32 %v494, %v617
    %v654 = vadd.f32 %v543, %v618
    %v655 = vadd.f32 %v592, %v619
    %v656 = vadd.f32 %v448, %v616
    %v657 = vadd.f32 %v497, %v617
    %v658 = vadd.f32 %v546, %v618
    %v659 = vadd.f32 %v595, %v619
    %v660 = vadd.f32 %v450, %v616
    %v661 = vadd.f32 %v499, %v617
    %v662 = vadd.f32 %v548, %v618
    %v663 = vadd.f32 %v597, %v619
    %v664 = vadd.f32 %v453, %v616
    %v665 = vadd.f32 %v502, %v617
    %v666 = vadd.f32 %v551, %v618
    %v667 = vadd.f32 %v600, %v619
    %v668 = vadd.f32 %v455, %v616
    %v669 = vadd.f32 %v504, %v617
    %v670 = vadd.f32 %v553, %v618
    %v671 = vadd.f32 %v602, %v619
    %v672 = vadd.f32 %v458, %v616
    %v673 = vadd.f32 %v507, %v617
    %v674 = vadd.f32 %v556, %v618
    %v675 = vadd.f32 %v605, %v619
    %v676 = vadd.f32 %v460, %v616
    %v677 = vadd.f32 %v509, %v617
    %v678 = vadd.f32 %v558, %v618
    %v679 = vadd.f32 %v607, %v619
    %v680 = vadd.f32 %v463, %v616
    %v681 = vadd.f32 %v512, %v617
    %v682 = vadd.f32 %v561, %v618
    %v683 = vadd.f32 %v610, %v619
    %v684 = vadd.f32 %v465, %v616
    %v685 = vadd.f32 %v514, %v617
    %v686 = vadd.f32 %v563, %v618
    %v687 = vadd.f32 %v612, %v619
    %v688 = vmax.f32 %v624, 0.0
    %v689 = vmax.f32 %v625, 0.0
    %v690 = vmax.f32 %v626, 0.0
    %v691 = vmax.f32 %v627, 0.0
    %v692 = vmax.f32 %v628, 0.0
    %v693 = vmax.f32 %v629, 0.0
    %v694 = vmax.f32 %v630, 0.0
    %v695 = vmax.f32 %v631, 0.0
    %v696 = vmax.f32 %v632, 0.0
    %v697 = vmax.f32 %v633, 0.0
    %v698 = vmax.f32 %v634, 0.0
    %v699 = vmax.f32 %v635, 0.0
    %v700 = vmax.f32 %v636, 0.0
    %v701 = vmax.f32 %v637, 0.0
    %v702 = vmax.f32 %v638, 0.0
    %v703 = vmax.f32 %v639, 0.0
    %v704 = vmax.f32 %v640, 0.0
    %v705 = vmax.f32 %v641, 0.0
    %v706 = vmax.f32 %v642, 0.0
    %v707 = vmax.f32 %v643, 0.0
    %v708 = vmax.f32 %v644, 0.0
    %v709 = vmax.f32 %v645, 0.0
    %v710 = vmax.f32 %v646, 0.0
    %v711 = vmax.f32 %v647, 0.0
    %v712 = vmax.f32 %v648, 0.0
    %v713 = vmax.f32 %v649, 0.0
    %v714 = vmax.f32 %v650, 0.0
    %v715 = vmax.f32 %v651, 0.0
    %v716 = vmax.f32 %v652, 0.0
    %v717 = vmax.f32 %v653, 0.0
    %v718 = vmax.f32 %v654, 0.0
    %v719 = vmax.f32 %v655, 0.0
    %v720 = vmax.f32 %v656, 0.0
    %v721 = vmax.f32 %v657, 0.0
    %v722 = vmax.f32 %v658, 0.0
    %v723 = vmax.f32 %v659, 0.0
    %v724 = vmax.f32 %v660, 0.0
    %v725 = vmax.f32 %v661, 0.0
    %v726 = vmax.f32 %v662, 0.0
    %v727 = vmax.f32 %v663, 0.0
    %v728 = vmax.f32 %v664, 0.0
    %v729 = vmax.f32 %v665, 0.0
    %v730 = vmax.f32 %v666, 0.0
    %v731 = vmax.f32 %v667, 0.0
    %v732 = vmax.f32 %v668, 0.0
    %v733 = vmax.f32 %v669, 0.0
    %v734 = vmax.f32 %v670, 0.0
    %v735 = vmax.f32 %v671, 0.0
    %v736 = vmax.f32 %v672, 0.0
    %v737 = vmax.f32 %v673, 0.0
    %v738 = vmax.f32 %v674, 0.0
    %v739 = vmax.f32 %v675, 0.0
    %v740 = vmax.f32 %v676, 0.0
    %v741 = vmax.f32 %v677, 0.0
    %v742 = vmax.f32 %v678, 0.0
    %v743 = vmax.f32 %v679, 0.0
    %v744 = vmax.f32 %v680, 0.0
    %v745 = vmax.f32 %v681, 0.0
    %v746 = vmax.f32 %v682, 0.0
    %v747 = vmax.f32 %v683, 0.0
    %v748 = vmax.f32 %v684, 0.0
    %v749 = vmax.f32 %v685, 0.0
    %v750 = vmax.f32 %v686, 0.0
    %v751 = vmax.f32 %v687, 0.0
    %v752 = vpack.c.bf16 %v692, %v688
    %v753 = vpack.c.bf16 %v693, %v689
    %v754 = vpack.c.bf16 %v694, %v690
    %v755 = vpack.c.bf16 %v695, %v691
    %v756 = vpack.c.bf16 %v700, %v696
    %v757 = vpack.c.bf16 %v701, %v697
    %v758 = vpack.c.bf16 %v702, %v698
    %v759 = vpack.c.bf16 %v703, %v699
    %v760 = vpack.c.bf16 %v708, %v704
    %v761 = vpack.c.bf16 %v709, %v705
    %v762 = vpack.c.bf16 %v710, %v706
    %v763 = vpack.c.bf16 %v711, %v707
    %v764 = vpack.c.bf16 %v716, %v712
    %v765 = vpack.c.bf16 %v717, %v713
    %v766 = vpack.c.bf16 %v718, %v714
    %v767 = vpack.c.bf16 %v719, %v715
    %v768 = vpack.c.bf16 %v724, %v720
    %v769 = vpack.c.bf16 %v725, %v721
    %v770 = vpack.c.bf16 %v726, %v722
    %v771 = vpack.c.bf16 %v727, %v723
    %v772 = vpack.c.bf16 %v732, %v728
    %v773 = vpack.c.bf16 %v733, %v729
    %v774 = vpack.c.bf16 %v734, %v730
    %v775 = vpack.c.bf16 %v735, %v731
    %v776 = vpack.c.bf16 %v740, %v736
    %v777 = vpack.c.bf16 %v741, %v737
    %v778 = vpack.c.bf16 %v742, %v738
    %v779 = vpack.c.bf16 %v743, %v739
    %v780 = vpack.c.bf16 %v748, %v744
    %v781 = vpack.c.bf16 %v749, %v745
    %v782 = vpack.c.bf16 %v750, %v746
    %v783 = vpack.c.bf16 %v751, %v747
    %v784 = vld [vmem:[#allocation3] sm:$0xff]
    %v785 = vld [vmem:[#allocation3 + $0x8] sm:$0xff]
    %v786 = vld [vmem:[#allocation3 + $0x10] sm:$0xff]
    %v787 = vld [vmem:[#allocation3 + $0x18] sm:$0xff]
    %v788 = vld [vmem:[#allocation3 + $0x20] sm:$0xff]
    %v789 = vld [vmem:[#allocation3 + $0x28] sm:$0xff]
    %v790 = vld [vmem:[#allocation3 + $0x30] sm:$0xff]
    %v791 = vld [vmem:[#allocation3 + $0x38] sm:$0xff]
    %v792 = vld [vmem:[#allocation3 + $0x40] sm:$0xff]
    %v793 = vld [vmem:[#allocation3 + $0x48] sm:$0xff]
    %v794 = vld [vmem:[#allocation3 + $0x50] sm:$0xff]
    %v795 = vld [vmem:[#allocation3 + $0x58] sm:$0xff]
    %v796 = vld [vmem:[#allocation3 + $0x60] sm:$0xff]
    %v797 = vld [vmem:[#allocation3 + $0x68] sm:$0xff]
    %v798 = vld [vmem:[#allocation3 + $0x70] sm:$0xff]
    %v799 = vld [vmem:[#allocation3 + $0x78] sm:$0xff]
    %v800 = vld [vmem:[#allocation3 + $0x80] sm:$0xff]
    %v801 = vld [vmem:[#allocation3 + $0x88] sm:$0xff]
    %v802 = vld [vmem:[#allocation3 + $0x90] sm:$0xff]
    %v803 = vld [vmem:[#allocation3 + $0x98] sm:$0xff]
    %v804 = vld [vmem:[#allocation3 + $0xa0] sm:$0xff]
    %v805 = vld [vmem:[#allocation3 + $0xa8] sm:$0xff]
    %v806 = vld [vmem:[#allocation3 + $0xb0] sm:$0xff]
    %v807 = vld [vmem:[#allocation3 + $0xb8] sm:$0xff]
    %v808 = vld [vmem:[#allocation3 + $0xc0] sm:$0xff]
    %v809 = vld [vmem:[#allocation3 + $0xc8] sm:$0xff]
    %v810 = vld [vmem:[#allocation3 + $0xd0] sm:$0xff]
    %v811 = vld [vmem:[#allocation3 + $0xd8] sm:$0xff]
    %v812 = vld [vmem:[#allocation3 + $0xe0] sm:$0xff]
    %v813 = vld [vmem:[#allocation3 + $0xe8] sm:$0xff]
    %v814 = vld [vmem:[#allocation3 + $0xf0] sm:$0xff]
    %v815 = vld [vmem:[#allocation3 + $0xf8] sm:$0xff]
    %v816 = vld [vmem:[#allocation3 + $0x100] sm:$0xff]
    %v817 = vld [vmem:[#allocation3 + $0x108] sm:$0xff]
    %v818 = vld [vmem:[#allocation3 + $0x110] sm:$0xff]
    %v819 = vld [vmem:[#allocation3 + $0x118] sm:$0xff]
    %v820 = vld [vmem:[#allocation3 + $0x120] sm:$0xff]
    %v821 = vld [vmem:[#allocation3 + $0x128] sm:$0xff]
    %v822 = vld [vmem:[#allocation3 + $0x130] sm:$0xff]
    %v823 = vld [vmem:[#allocation3 + $0x138] sm:$0xff]
    %v824 = vld [vmem:[#allocation3 + $0x140] sm:$0xff]
    %v825 = vld [vmem:[#allocation3 + $0x148] sm:$0xff]
    %v826 = vld [vmem:[#allocation3 + $0x150] sm:$0xff]
    %v827 = vld [vmem:[#allocation3 + $0x158] sm:$0xff]
    %v828 = vld [vmem:[#allocation3 + $0x160] sm:$0xff]
    %v829 = vld [vmem:[#allocation3 + $0x168] sm:$0xff]
    %v830 = vld [vmem:[#allocation3 + $0x170] sm:$0xff]
    %v831 = vld [vmem:[#allocation3 + $0x178] sm:$0xff]
    %v832 = vld [vmem:[#allocation3 + $0x180] sm:$0xff]
    %v833 = vld [vmem:[#allocation3 + $0x188] sm:$0xff]
    %v834 = vld [vmem:[#allocation3 + $0x190] sm:$0xff]
    %v835 = vld [vmem:[#allocation3 + $0x198] sm:$0xff]
    %v836 = vld [vmem:[#allocation3 + $0x1a0] sm:$0xff]
    %v837 = vld [vmem:[#allocation3 + $0x1a8] sm:$0xff]
    %v838 = vld [vmem:[#allocation3 + $0x1b0] sm:$0xff]
    %v839 = vld [vmem:[#allocation3 + $0x1b8] sm:$0xff]
    %v840 = vld [vmem:[#allocation3 + $0x1c0] sm:$0xff]
    %v841 = vld [vmem:[#allocation3 + $0x1c8] sm:$0xff]
    %v842 = vld [vmem:[#allocation3 + $0x1d0] sm:$0xff]
    %v843 = vld [vmem:[#allocation3 + $0x1d8] sm:$0xff]
    %v844 = vld [vmem:[#allocation3 + $0x1e0] sm:$0xff]
    %v845 = vld [vmem:[#allocation3 + $0x1e8] sm:$0xff]
    %v846 = vld [vmem:[#allocation3 + $0x1f0] sm:$0xff]
    %v847 = vld [vmem:[#allocation3 + $0x1f8] sm:$0xff]
    %v848 = vld [vmem:[%s6] sm:$0x3]
    %v850 = vperm.slane %v848, 0
    %v851 = vperm.slane %v848, 1
    %v918 = vunpack.c.l.b16 %v784
    %v919 = vunpack.c.h.b16 %v784
    %v920 = vunpack.c.l.b16 %v785
    %v921 = vunpack.c.h.b16 %v785
    %v922 = vunpack.c.l.b16 %v786
    %v923 = vunpack.c.h.b16 %v786
    %v924 = vunpack.c.l.b16 %v787
    %v925 = vunpack.c.h.b16 %v787
    %v926 = vunpack.c.l.b16 %v788
    %v927 = vunpack.c.h.b16 %v788
    %v928 = vunpack.c.l.b16 %v789
    %v929 = vunpack.c.h.b16 %v789
    %v930 = vunpack.c.l.b16 %v790
    %v931 = vunpack.c.h.b16 %v790
    %v932 = vunpack.c.l.b16 %v791
    %v933 = vunpack.c.h.b16 %v791
    %v934 = vunpack.c.l.b16 %v792
    %v935 = vunpack.c.h.b16 %v792
    %v936 = vunpack.c.l.b16 %v793
    %v937 = vunpack.c.h.b16 %v793
    %v938 = vunpack.c.l.b16 %v794
    %v939 = vunpack.c.h.b16 %v794
    %v940 = vunpack.c.l.b16 %v795
    %v941 = vunpack.c.h.b16 %v795
    %v942 = vunpack.c.l.b16 %v796
    %v943 = vunpack.c.h.b16 %v796
    %v944 = vunpack.c.l.b16 %v797
    %v945 = vunpack.c.h.b16 %v797
    %v946 = vunpack.c.l.b16 %v798
    %v947 = vunpack.c.h.b16 %v798
    %v948 = vunpack.c.l.b16 %v799
    %v949 = vunpack.c.h.b16 %v799
    %v950 = vunpack.c.l.b16 %v800
    %v951 = vunpack.c.h.b16 %v800
    %v952 = vunpack.c.l.b16 %v801
    %v953 = vunpack.c.h.b16 %v801
    %v954 = vunpack.c.l.b16 %v802
    %v955 = vunpack.c.h.b16 %v802
    %v956 = vunpack.c.l.b16 %v803
    %v957 = vunpack.c.h.b16 %v803
    %v958 = vunpack.c.l.b16 %v804
    %v959 = vunpack.c.h.b16 %v804
    %v960 = vunpack.c.l.b16 %v805
    %v961 = vunpack.c.h.b16 %v805
    %v962 = vunpack.c.l.b16 %v806
    %v963 = vunpack.c.h.b16 %v806
    %v964 = vunpack.c.l.b16 %v807
    %v965 = vunpack.c.h.b16 %v807
    %v966 = vunpack.c.l.b16 %v808
    %v967 = vunpack.c.h.b16 %v808
    %v968 = vunpack.c.l.b16 %v809
    %v969 = vunpack.c.h.b16 %v809
    %v970 = vunpack.c.l.b16 %v810
    %v971 = vunpack.c.h.b16 %v810
    %v972 = vunpack.c.l.b16 %v811
    %v973 = vunpack.c.h.b16 %v811
    %v974 = vunpack.c.l.b16 %v812
    %v975 = vunpack.c.h.b16 %v812
    %v976 = vunpack.c.l.b16 %v813
    %v977 = vunpack.c.h.b16 %v813
    %v978 = vunpack.c.l.b16 %v814
    %v979 = vunpack.c.h.b16 %v814
    %v980 = vunpack.c.l.b16 %v815
    %v981 = vunpack.c.h.b16 %v815
    %v982 = vunpack.c.l.b16 %v816
    %v983 = vunpack.c.h.b16 %v816
    %v984 = vunpack.c.l.b16 %v817
    %v985 = vunpack.c.h.b16 %v817
    %v986 = vunpack.c.l.b16 %v818
    %v987 = vunpack.c.h.b16 %v818
    %v988 = vunpack.c.l.b16 %v819
    %v989 = vunpack.c.h.b16 %v819
    %v990 = vunpack.c.l.b16 %v820
    %v991 = vunpack.c.h.b16 %v820
    %v992 = vunpack.c.l.b16 %v821
    %v993 = vunpack.c.h.b16 %v821
    %v994 = vunpack.c.l.b16 %v822
    %v995 = vunpack.c.h.b16 %v822
    %v996 = vunpack.c.l.b16 %v823
    %v997 = vunpack.c.h.b16 %v823
    %v998 = vunpack.c.l.b16 %v824
    %v999 = vunpack.c.h.b16 %v824
    %v1000 = vunpack.c.l.b16 %v825
    %v1001 = vunpack.c.h.b16 %v825
    %v1002 = vunpack.c.l.b16 %v826
    %v1003 = vunpack.c.h.b16 %v826
    %v1004 = vunpack.c.l.b16 %v827
    %v1005 = vunpack.c.h.b16 %v827
    %v1006 = vunpack.c.l.b16 %v828
    %v1007 = vunpack.c.h.b16 %v828
    %v1008 = vunpack.c.l.b16 %v829
    %v1009 = vunpack.c.h.b16 %v829
    %v1010 = vunpack.c.l.b16 %v830
    %v1011 = vunpack.c.h.b16 %v830
    %v1012 = vunpack.c.l.b16 %v831
    %v1013 = vunpack.c.h.b16 %v831
    %v1014 = vunpack.c.l.b16 %v832
    %v1015 = vunpack.c.h.b16 %v832
    %v1016 = vunpack.c.l.b16 %v833
    %v1017 = vunpack.c.h.b16 %v833
    %v1018 = vunpack.c.l.b16 %v834
    %v1019 = vunpack.c.h.b16 %v834
    %v1020 = vunpack.c.l.b16 %v835
    %v1021 = vunpack.c.h.b16 %v835
    %v1022 = vunpack.c.l.b16 %v836
    %v1023 = vunpack.c.h.b16 %v836
    %v1024 = vunpack.c.l.b16 %v837
    %v1025 = vunpack.c.h.b16 %v837
    %v1026 = vunpack.c.l.b16 %v838
    %v1027 = vunpack.c.h.b16 %v838
    %v1028 = vunpack.c.l.b16 %v839
    %v1029 = vunpack.c.h.b16 %v839
    %v1030 = vunpack.c.l.b16 %v840
    %v1031 = vunpack.c.h.b16 %v840
    %v1032 = vunpack.c.l.b16 %v841
    %v1033 = vunpack.c.h.b16 %v841
    %v1034 = vunpack.c.l.b16 %v842
    %v1035 = vunpack.c.h.b16 %v842
    %v1036 = vunpack.c.l.b16 %v843
    %v1037 = vunpack.c.h.b16 %v843
    %v1038 = vunpack.c.l.b16 %v844
    %v1039 = vunpack.c.h.b16 %v844
    %v1040 = vunpack.c.l.b16 %v845
    %v1041 = vunpack.c.h.b16 %v845
    %v1042 = vunpack.c.l.b16 %v846
    %v1043 = vunpack.c.h.b16 %v846
    %v1044 = vunpack.c.l.b16 %v847
    %v1045 = vunpack.c.h.b16 %v847
    %v1046 = vpack.c.b16 %v920, %v918
    %v1047 = vpack.c.b16 %v921, %v919
    %v1048 = vpack.c.b16 %v924, %v922
    %v1049 = vpack.c.b16 %v925, %v923
    %v1050 = vpack.c.b16 %v928, %v926
    %v1051 = vpack.c.b16 %v929, %v927
    %v1052 = vpack.c.b16 %v932, %v930
    %v1053 = vpack.c.b16 %v933, %v931
    %v1054 = vpack.c.b16 %v936, %v934
    %v1055 = vpack.c.b16 %v937, %v935
    %v1056 = vpack.c.b16 %v940, %v938
    %v1057 = vpack.c.b16 %v941, %v939
    %v1058 = vpack.c.b16 %v944, %v942
    %v1059 = vpack.c.b16 %v945, %v943
    %v1060 = vpack.c.b16 %v948, %v946
    %v1061 = vpack.c.b16 %v949, %v947
    %v1062 = vpack.c.b16 %v952, %v950
    %v1063 = vpack.c.b16 %v953, %v951
    %v1064 = vpack.c.b16 %v956, %v954
    %v1065 = vpack.c.b16 %v957, %v955
    %v1066 = vpack.c.b16 %v960, %v958
    %v1067 = vpack.c.b16 %v961, %v959
    %v1068 = vpack.c.b16 %v964, %v962
    %v1069 = vpack.c.b16 %v965, %v963
    %v1070 = vpack.c.b16 %v968, %v966
    %v1071 = vpack.c.b16 %v969, %v967
    %v1072 = vpack.c.b16 %v972, %v970
    %v1073 = vpack.c.b16 %v973, %v971
    %v1074 = vpack.c.b16 %v976, %v974
    %v1075 = vpack.c.b16 %v977, %v975
    %v1076 = vpack.c.b16 %v980, %v978
    %v1077 = vpack.c.b16 %v981, %v979
    %v1078 = vpack.c.b16 %v984, %v982
    %v1079 = vpack.c.b16 %v985, %v983
    %v1080 = vpack.c.b16 %v988, %v986
    %v1081 = vpack.c.b16 %v989, %v987
    %v1082 = vpack.c.b16 %v992, %v990
    %v1083 = vpack.c.b16 %v993, %v991
    %v1084 = vpack.c.b16 %v996, %v994
    %v1085 = vpack.c.b16 %v997, %v995
    %v1086 = vpack.c.b16 %v1000, %v998
    %v1087 = vpack.c.b16 %v1001, %v999
    %v1088 = vpack.c.b16 %v1004, %v1002
    %v1089 = vpack.c.b16 %v1005, %v1003
    %v1090 = vpack.c.b16 %v1008, %v1006
    %v1091 = vpack.c.b16 %v1009, %v1007
    %v1092 = vpack.c.b16 %v1012, %v1010
    %v1093 = vpack.c.b16 %v1013, %v1011
    %v1094 = vpack.c.b16 %v1016, %v1014
    %v1095 = vpack.c.b16 %v1017, %v1015
    %v1096 = vpack.c.b16 %v1020, %v1018
    %v1097 = vpack.c.b16 %v1021, %v1019
    %v1098 = vpack.c.b16 %v1024, %v1022
    %v1099 = vpack.c.b16 %v1025, %v1023
    %v1100 = vpack.c.b16 %v1028, %v1026
    %v1101 = vpack.c.b16 %v1029, %v1027
    %v1102 = vpack.c.b16 %v1032, %v1030
    %v1103 = vpack.c.b16 %v1033, %v1031
    %v1104 = vpack.c.b16 %v1036, %v1034
    %v1105 = vpack.c.b16 %v1037, %v1035
    %v1106 = vpack.c.b16 %v1040, %v1038
    %v1107 = vpack.c.b16 %v1041, %v1039
    %v1108 = vpack.c.b16 %v1044, %v1042
    %v1109 = vpack.c.b16 %v1045, %v1043
    %1174 = vmatpush.bf16.msra.mxu0 %v1060
    %1175 = vmatpush.bf16.msra.mxu0 %v1058
    %1176 = vmatpush.bf16.msra.mxu0 %v1056
    %1177 = vmatpush.bf16.msra.mxu0 %v1054
    %1178 = vmatpush.bf16.msra.mxu0 %v1052
    %1179 = vmatpush.bf16.msra.mxu0 %v1050
    %1180 = vmatpush.bf16.msra.mxu0 %v1048
    %1181 = vmatpush.bf16.msra.mxu0 %v1046
    %1182 = vmatmul.bf16.gmra.mxu0 %v752
    %v1183 = vpop.f32.mrf.mxu0
    %v1184 = vadd.f32 %v850, %v1183
    %v1185 = vpop.f32.mrf.mxu0
    %v1186 = vadd.f32 %v850, %v1185
    %1187 = vmatmul.bf16.gmra.mxu0 %v756
    %v1188 = vpop.f32.mrf.mxu0
    %v1189 = vadd.f32 %v850, %v1188
    %v1190 = vpop.f32.mrf.mxu0
    %v1191 = vadd.f32 %v850, %v1190
    %1192 = vmatmul.bf16.gmra.mxu0 %v760
    %v1193 = vpop.f32.mrf.mxu0
    %v1194 = vadd.f32 %v850, %v1193
    %v1195 = vpop.f32.mrf.mxu0
    %v1196 = vadd.f32 %v850, %v1195
    %1197 = vmatmul.bf16.gmra.mxu0 %v764
    %v1198 = vpop.f32.mrf.mxu0
    %v1199 = vadd.f32 %v850, %v1198
    %v1200 = vpop.f32.mrf.mxu0
    %v1201 = vadd.f32 %v850, %v1200
    %1202 = vmatmul.bf16.gmra.mxu0 %v768
    %v1203 = vpop.f32.mrf.mxu0
    %v1204 = vadd.f32 %v850, %v1203
    %v1205 = vpop.f32.mrf.mxu0
    %v1206 = vadd.f32 %v850, %v1205
    %1207 = vmatmul.bf16.gmra.mxu0 %v772
    %v1208 = vpop.f32.mrf.mxu0
    %v1209 = vadd.f32 %v850, %v1208
    %v1210 = vpop.f32.mrf.mxu0
    %v1211 = vadd.f32 %v850, %v1210
    %1212 = vmatmul.bf16.gmra.mxu0 %v776
    %v1213 = vpop.f32.mrf.mxu0
    %v1214 = vadd.f32 %v850, %v1213
    %v1215 = vpop.f32.mrf.mxu0
    %v1216 = vadd.f32 %v850, %v1215
    %1217 = vmatmul.bf16.gmra.mxu0 %v780
    %v1218 = vpop.f32.mrf.mxu0
    %v1219 = vadd.f32 %v850, %v1218
    %v1220 = vpop.f32.mrf.mxu0
    %v1221 = vadd.f32 %v850, %v1220
    %1222 = vdwg.mxu0
    %1223 = vmatpush.bf16.msra.mxu0 %v1076
    %1224 = vmatpush.bf16.msra.mxu0 %v1074
    %1225 = vmatpush.bf16.msra.mxu0 %v1072
    %1226 = vmatpush.bf16.msra.mxu0 %v1070
    %1227 = vmatpush.bf16.msra.mxu0 %v1068
    %1228 = vmatpush.bf16.msra.mxu0 %v1066
    %1229 = vmatpush.bf16.msra.mxu0 %v1064
    %1230 = vmatpush.bf16.msra.mxu0 %v1062
    %1231 = vmatmul.bf16.gmra.mxu0 %v753
    %v1232 = vpop.f32.mrf.mxu0
    %v1233 = vadd.f32 %v1184, %v1232
    %v1234 = vpop.f32.mrf.mxu0
    %v1235 = vadd.f32 %v1186, %v1234
    %1236 = vmatmul.bf16.gmra.mxu0 %v757
    %v1237 = vpop.f32.mrf.mxu0
    %v1238 = vadd.f32 %v1189, %v1237
    %v1239 = vpop.f32.mrf.mxu0
    %v1240 = vadd.f32 %v1191, %v1239
    %1241 = vmatmul.bf16.gmra.mxu0 %v761
    %v1242 = vpop.f32.mrf.mxu0
    %v1243 = vadd.f32 %v1194, %v1242
    %v1244 = vpop.f32.mrf.mxu0
    %v1245 = vadd.f32 %v1196, %v1244
    %1246 = vmatmul.bf16.gmra.mxu0 %v765
    %v1247 = vpop.f32.mrf.mxu0
    %v1248 = vadd.f32 %v1199, %v1247
    %v1249 = vpop.f32.mrf.mxu0
    %v1250 = vadd.f32 %v1201, %v1249
    %1251 = vmatmul.bf16.gmra.mxu0 %v769
    %v1252 = vpop.f32.mrf.mxu0
    %v1253 = vadd.f32 %v1204, %v1252
    %v1254 = vpop.f32.mrf.mxu0
    %v1255 = vadd.f32 %v1206, %v1254
    %1256 = vmatmul.bf16.gmra.mxu0 %v773
    %v1257 = vpop.f32.mrf.mxu0
    %v1258 = vadd.f32 %v1209, %v1257
    %v1259 = vpop.f32.mrf.mxu0
    %v1260 = vadd.f32 %v1211, %v1259
    %1261 = vmatmul.bf16.gmra.mxu0 %v777
    %v1262 = vpop.f32.mrf.mxu0
    %v1263 = vadd.f32 %v1214, %v1262
    %v1264 = vpop.f32.mrf.mxu0
    %v1265 = vadd.f32 %v1216, %v1264
    %1266 = vmatmul.bf16.gmra.mxu0 %v781
    %v1267 = vpop.f32.mrf.mxu0
    %v1268 = vadd.f32 %v1219, %v1267
    %v1269 = vpop.f32.mrf.mxu0
    %v1270 = vadd.f32 %v1221, %v1269
    %1271 = vdwg.mxu0
    %1272 = vmatpush.bf16.msra.mxu0 %v1092
    %1273 = vmatpush.bf16.msra.mxu0 %v1090
    %1274 = vmatpush.bf16.msra.mxu0 %v1088
    %1275 = vmatpush.bf16.msra.mxu0 %v1086
    %1276 = vmatpush.bf16.msra.mxu0 %v1084
    %1277 = vmatpush.bf16.msra.mxu0 %v1082
    %1278 = vmatpush.bf16.msra.mxu0 %v1080
    %1279 = vmatpush.bf16.msra.mxu0 %v1078
    %1280 = vmatmul.bf16.gmra.mxu0 %v754
    %v1281 = vpop.f32.mrf.mxu0
    %v1282 = vadd.f32 %v1233, %v1281
    %v1283 = vpop.f32.mrf.mxu0
    %v1284 = vadd.f32 %v1235, %v1283
    %1285 = vmatmul.bf16.gmra.mxu0 %v758
    %v1286 = vpop.f32.mrf.mxu0
    %v1287 = vadd.f32 %v1238, %v1286
    %v1288 = vpop.f32.mrf.mxu0
    %v1289 = vadd.f32 %v1240, %v1288
    %1290 = vmatmul.bf16.gmra.mxu0 %v762
    %v1291 = vpop.f32.mrf.mxu0
    %v1292 = vadd.f32 %v1243, %v1291
    %v1293 = vpop.f32.mrf.mxu0
    %v1294 = vadd.f32 %v1245, %v1293
    %1295 = vmatmul.bf16.gmra.mxu0 %v766
    %v1296 = vpop.f32.mrf.mxu0
    %v1297 = vadd.f32 %v1248, %v1296
    %v1298 = vpop.f32.mrf.mxu0
    %v1299 = vadd.f32 %v1250, %v1298
    %1300 = vmatmul.bf16.gmra.mxu0 %v770
    %v1301 = vpop.f32.mrf.mxu0
    %v1302 = vadd.f32 %v1253, %v1301
    %v1303 = vpop.f32.mrf.mxu0
    %v1304 = vadd.f32 %v1255, %v1303
    %1305 = vmatmul.bf16.gmra.mxu0 %v774
    %v1306 = vpop.f32.mrf.mxu0
    %v1307 = vadd.f32 %v1258, %v1306
    %v1308 = vpop.f32.mrf.mxu0
    %v1309 = vadd.f32 %v1260, %v1308
    %1310 = vmatmul.bf16.gmra.mxu0 %v778
    %v1311 = vpop.f32.mrf.mxu0
    %v1312 = vadd.f32 %v1263, %v1311
    %v1313 = vpop.f32.mrf.mxu0
    %v1314 = vadd.f32 %v1265, %v1313
    %1315 = vmatmul.bf16.gmra.mxu0 %v782
    %v1316 = vpop.f32.mrf.mxu0
    %v1317 = vadd.f32 %v1268, %v1316
    %v1318 = vpop.f32.mrf.mxu0
    %v1319 = vadd.f32 %v1270, %v1318
    %1320 = vdwg.mxu0
    %1321 = vmatpush.bf16.msra.mxu0 %v1108
    %1322 = vmatpush.bf16.msra.mxu0 %v1106
    %1323 = vmatpush.bf16.msra.mxu0 %v1104
    %1324 = vmatpush.bf16.msra.mxu0 %v1102
    %1325 = vmatpush.bf16.msra.mxu0 %v1100
    %1326 = vmatpush.bf16.msra.mxu0 %v1098
    %1327 = vmatpush.bf16.msra.mxu0 %v1096
    %1328 = vmatpush.bf16.msra.mxu0 %v1094
    %1329 = vmatmul.bf16.gmra.mxu0 %v755
    %v1330 = vpop.f32.mrf.mxu0
    %v1331 = vadd.f32 %v1282, %v1330
    %v1332 = vpop.f32.mrf.mxu0
    %v1333 = vadd.f32 %v1284, %v1332
    %1334 = vmatmul.bf16.gmra.mxu0 %v759
    %v1335 = vpop.f32.mrf.mxu0
    %v1336 = vadd.f32 %v1287, %v1335
    %v1337 = vpop.f32.mrf.mxu0
    %v1338 = vadd.f32 %v1289, %v1337
    %1339 = vmatmul.bf16.gmra.mxu0 %v763
    %v1340 = vpop.f32.mrf.mxu0
    %v1341 = vadd.f32 %v1292, %v1340
    %v1342 = vpop.f32.mrf.mxu0
    %v1343 = vadd.f32 %v1294, %v1342
    %1344 = vmatmul.bf16.gmra.mxu0 %v767
    %v1345 = vpop.f32.mrf.mxu0
    %v1346 = vadd.f32 %v1297, %v1345
    %v1347 = vpop.f32.mrf.mxu0
    %v1348 = vadd.f32 %v1299, %v1347
    %1349 = vmatmul.bf16.gmra.mxu0 %v771
    %v1350 = vpop.f32.mrf.mxu0
    %v1351 = vadd.f32 %v1302, %v1350
    %v1352 = vpop.f32.mrf.mxu0
    %v1353 = vadd.f32 %v1304, %v1352
    %1354 = vmatmul.bf16.gmra.mxu0 %v775
    %v1355 = vpop.f32.mrf.mxu0
    %v1356 = vadd.f32 %v1307, %v1355
    %v1357 = vpop.f32.mrf.mxu0
    %v1358 = vadd.f32 %v1309, %v1357
    %1359 = vmatmul.bf16.gmra.mxu0 %v779
    %v1360 = vpop.f32.mrf.mxu0
    %v1361 = vadd.f32 %v1312, %v1360
    %v1362 = vpop.f32.mrf.mxu0
    %v1363 = vadd.f32 %v1314, %v1362
    %1364 = vmatmul.bf16.gmra.mxu0 %v783
    %v1365 = vpop.f32.mrf.mxu0
    %v1366 = vadd.f32 %v1317, %v1365
    %v1367 = vpop.f32.mrf.mxu0
    %v1368 = vadd.f32 %v1319, %v1367
    %1369 = vdwg.mxu0
    %1370 = vmatpush.bf16.msra.mxu0 %v1061
    %1371 = vmatpush.bf16.msra.mxu0 %v1059
    %1372 = vmatpush.bf16.msra.mxu0 %v1057
    %1373 = vmatpush.bf16.msra.mxu0 %v1055
    %1374 = vmatpush.bf16.msra.mxu0 %v1053
    %1375 = vmatpush.bf16.msra.mxu0 %v1051
    %1376 = vmatpush.bf16.msra.mxu0 %v1049
    %1377 = vmatpush.bf16.msra.mxu0 %v1047
    %1378 = vmatmul.bf16.gmra.mxu0 %v752
    %v1379 = vpop.f32.mrf.mxu0
    %v1380 = vadd.f32 %v851, %v1379
    %v1381 = vpop.f32.mrf.mxu0
    %v1382 = vadd.f32 %v851, %v1381
    %1383 = vmatmul.bf16.gmra.mxu0 %v756
    %v1384 = vpop.f32.mrf.mxu0
    %v1385 = vadd.f32 %v851, %v1384
    %v1386 = vpop.f32.mrf.mxu0
    %v1387 = vadd.f32 %v851, %v1386
    %1388 = vmatmul.bf16.gmra.mxu0 %v760
    %v1389 = vpop.f32.mrf.mxu0
    %v1390 = vadd.f32 %v851, %v1389
    %v1391 = vpop.f32.mrf.mxu0
    %v1392 = vadd.f32 %v851, %v1391
    %1393 = vmatmul.bf16.gmra.mxu0 %v764
    %v1394 = vpop.f32.mrf.mxu0
    %v1395 = vadd.f32 %v851, %v1394
    %v1396 = vpop.f32.mrf.mxu0
    %v1397 = vadd.f32 %v851, %v1396
    %1398 = vmatmul.bf16.gmra.mxu0 %v768
    %v1399 = vpop.f32.mrf.mxu0
    %v1400 = vadd.f32 %v851, %v1399
    %v1401 = vpop.f32.mrf.mxu0
    %v1402 = vadd.f32 %v851, %v1401
    %1403 = vmatmul.bf16.gmra.mxu0 %v772
    %v1404 = vpop.f32.mrf.mxu0
    %v1405 = vadd.f32 %v851, %v1404
    %v1406 = vpop.f32.mrf.mxu0
    %v1407 = vadd.f32 %v851, %v1406
    %1408 = vmatmul.bf16.gmra.mxu0 %v776
    %v1409 = vpop.f32.mrf.mxu0
    %v1410 = vadd.f32 %v851, %v1409
    %v1411 = vpop.f32.mrf.mxu0
    %v1412 = vadd.f32 %v851, %v1411
    %1413 = vmatmul.bf16.gmra.mxu0 %v780
    %v1414 = vpop.f32.mrf.mxu0
    %v1415 = vadd.f32 %v851, %v1414
    %v1416 = vpop.f32.mrf.mxu0
    %v1417 = vadd.f32 %v851, %v1416
    %1418 = vdwg.mxu0
    %1419 = vmatpush.bf16.msra.mxu0 %v1077
    %1420 = vmatpush.bf16.msra.mxu0 %v1075
    %1421 = vmatpush.bf16.msra.mxu0 %v1073
    %1422 = vmatpush.bf16.msra.mxu0 %v1071
    %1423 = vmatpush.bf16.msra.mxu0 %v1069
    %1424 = vmatpush.bf16.msra.mxu0 %v1067
    %1425 = vmatpush.bf16.msra.mxu0 %v1065
    %1426 = vmatpush.bf16.msra.mxu0 %v1063
    %1427 = vmatmul.bf16.gmra.mxu0 %v753
    %v1428 = vpop.f32.mrf.mxu0
    %v1429 = vadd.f32 %v1380, %v1428
    %v1430 = vpop.f32.mrf.mxu0
    %v1431 = vadd.f32 %v1382, %v1430
    %1432 = vmatmul.bf16.gmra.mxu0 %v757
    %v1433 = vpop.f32.mrf.mxu0
    %v1434 = vadd.f32 %v1385, %v1433
    %v1435 = vpop.f32.mrf.mxu0
    %v1436 = vadd.f32 %v1387, %v1435
    %1437 = vmatmul.bf16.gmra.mxu0 %v761
    %v1438 = vpop.f32.mrf.mxu0
    %v1439 = vadd.f32 %v1390, %v1438
    %v1440 = vpop.f32.mrf.mxu0
    %v1441 = vadd.f32 %v1392, %v1440
    %1442 = vmatmul.bf16.gmra.mxu0 %v765
    %v1443 = vpop.f32.mrf.mxu0
    %v1444 = vadd.f32 %v1395, %v1443
    %v1445 = vpop.f32.mrf.mxu0
    %v1446 = vadd.f32 %v1397, %v1445
    %1447 = vmatmul.bf16.gmra.mxu0 %v769
    %v1448 = vpop.f32.mrf.mxu0
    %v1449 = vadd.f32 %v1400, %v1448
    %v1450 = vpop.f32.mrf.mxu0
    %v1451 = vadd.f32 %v1402, %v1450
    %1452 = vmatmul.bf16.gmra.mxu0 %v773
    %v1453 = vpop.f32.mrf.mxu0
    %v1454 = vadd.f32 %v1405, %v1453
    %v1455 = vpop.f32.mrf.mxu0
    %v1456 = vadd.f32 %v1407, %v1455
    %1457 = vmatmul.bf16.gmra.mxu0 %v777
    %v1458 = vpop.f32.mrf.mxu0
    %v1459 = vadd.f32 %v1410, %v1458
    %v1460 = vpop.f32.mrf.mxu0
    %v1461 = vadd.f32 %v1412, %v1460
    %1462 = vmatmul.bf16.gmra.mxu0 %v781
    %v1463 = vpop.f32.mrf.mxu0
    %v1464 = vadd.f32 %v1415, %v1463
    %v1465 = vpop.f32.mrf.mxu0
    %v1466 = vadd.f32 %v1417, %v1465
    %1467 = vdwg.mxu0
    %1468 = vmatpush.bf16.msra.mxu0 %v1093
    %1469 = vmatpush.bf16.msra.mxu0 %v1091
    %1470 = vmatpush.bf16.msra.mxu0 %v1089
    %1471 = vmatpush.bf16.msra.mxu0 %v1087
    %1472 = vmatpush.bf16.msra.mxu0 %v1085
    %1473 = vmatpush.bf16.msra.mxu0 %v1083
    %1474 = vmatpush.bf16.msra.mxu0 %v1081
    %1475 = vmatpush.bf16.msra.mxu0 %v1079
    %1476 = vmatmul.bf16.gmra.mxu0 %v754
    %v1477 = vpop.f32.mrf.mxu0
    %v1478 = vadd.f32 %v1429, %v1477
    %v1479 = vpop.f32.mrf.mxu0
    %v1480 = vadd.f32 %v1431, %v1479
    %1481 = vmatmul.bf16.gmra.mxu0 %v758
    %v1482 = vpop.f32.mrf.mxu0
    %v1483 = vadd.f32 %v1434, %v1482
    %v1484 = vpop.f32.mrf.mxu0
    %v1485 = vadd.f32 %v1436, %v1484
    %1486 = vmatmul.bf16.gmra.mxu0 %v762
    %v1487 = vpop.f32.mrf.mxu0
    %v1488 = vadd.f32 %v1439, %v1487
    %v1489 = vpop.f32.mrf.mxu0
    %v1490 = vadd.f32 %v1441, %v1489
    %1491 = vmatmul.bf16.gmra.mxu0 %v766
    %v1492 = vpop.f32.mrf.mxu0
    %v1493 = vadd.f32 %v1444, %v1492
    %v1494 = vpop.f32.mrf.mxu0
    %v1495 = vadd.f32 %v1446, %v1494
    %1496 = vmatmul.bf16.gmra.mxu0 %v770
    %v1497 = vpop.f32.mrf.mxu0
    %v1498 = vadd.f32 %v1449, %v1497
    %v1499 = vpop.f32.mrf.mxu0
    %v1500 = vadd.f32 %v1451, %v1499
    %1501 = vmatmul.bf16.gmra.mxu0 %v774
    %v1502 = vpop.f32.mrf.mxu0
    %v1503 = vadd.f32 %v1454, %v1502
    %v1504 = vpop.f32.mrf.mxu0
    %v1505 = vadd.f32 %v1456, %v1504
    %1506 = vmatmul.bf16.gmra.mxu0 %v778
    %v1507 = vpop.f32.mrf.mxu0
    %v1508 = vadd.f32 %v1459, %v1507
    %v1509 = vpop.f32.mrf.mxu0
    %v1510 = vadd.f32 %v1461, %v1509
    %1511 = vmatmul.bf16.gmra.mxu0 %v782
    %v1512 = vpop.f32.mrf.mxu0
    %v1513 = vadd.f32 %v1464, %v1512
    %v1514 = vpop.f32.mrf.mxu0
    %v1515 = vadd.f32 %v1466, %v1514
    %1516 = vdwg.mxu0
    %1517 = vmatpush.bf16.msra.mxu0 %v1109
    %1518 = vmatpush.bf16.msra.mxu0 %v1107
    %1519 = vmatpush.bf16.msra.mxu0 %v1105
    %1520 = vmatpush.bf16.msra.mxu0 %v1103
    %1521 = vmatpush.bf16.msra.mxu0 %v1101
    %1522 = vmatpush.bf16.msra.mxu0 %v1099
    %1523 = vmatpush.bf16.msra.mxu0 %v1097
    %1524 = vmatpush.bf16.msra.mxu0 %v1095
    %1525 = vmatmul.bf16.gmra.mxu0 %v755
    %v1526 = vpop.f32.mrf.mxu0
    %v1527 = vadd.f32 %v1478, %v1526
    %v1528 = vpop.f32.mrf.mxu0
    %v1529 = vadd.f32 %v1480, %v1528
    %1530 = vmatmul.bf16.gmra.mxu0 %v759
    %v1531 = vpop.f32.mrf.mxu0
    %v1532 = vadd.f32 %v1483, %v1531
    %v1533 = vpop.f32.mrf.mxu0
    %v1534 = vadd.f32 %v1485, %v1533
    %1535 = vmatmul.bf16.gmra.mxu0 %v763
    %v1536 = vpop.f32.mrf.mxu0
    %v1537 = vadd.f32 %v1488, %v1536
    %v1538 = vpop.f32.mrf.mxu0
    %v1539 = vadd.f32 %v1490, %v1538
    %1540 = vmatmul.bf16.gmra.mxu0 %v767
    %v1541 = vpop.f32.mrf.mxu0
    %v1542 = vadd.f32 %v1493, %v1541
    %v1543 = vpop.f32.mrf.mxu0
    %v1544 = vadd.f32 %v1495, %v1543
    %1545 = vmatmul.bf16.gmra.mxu0 %v771
    %v1546 = vpop.f32.mrf.mxu0
    %v1547 = vadd.f32 %v1498, %v1546
    %v1548 = vpop.f32.mrf.mxu0
    %v1549 = vadd.f32 %v1500, %v1548
    %1550 = vmatmul.bf16.gmra.mxu0 %v775
    %v1551 = vpop.f32.mrf.mxu0
    %v1552 = vadd.f32 %v1503, %v1551
    %v1553 = vpop.f32.mrf.mxu0
    %v1554 = vadd.f32 %v1505, %v1553
    %1555 = vmatmul.bf16.gmra.mxu0 %v779
    %v1556 = vpop.f32.mrf.mxu0
    %v1557 = vadd.f32 %v1508, %v1556
    %v1558 = vpop.f32.mrf.mxu0
    %v1559 = vadd.f32 %v1510, %v1558
    %1560 = vmatmul.bf16.gmra.mxu0 %v783
    %v1561 = vpop.f32.mrf.mxu0
    %v1562 = vadd.f32 %v1513, %v1561
    %v1563 = vpop.f32.mrf.mxu0
    %v1564 = vadd.f32 %v1515, %v1563
    %1565 = vdwg.mxu0
    %v1566 = vmax.f32 %v1331, 0.0
    %v1567 = vmax.f32 %v1527, 0.0
    %v1568 = vmax.f32 %v1333, 0.0
    %v1569 = vmax.f32 %v1529, 0.0
    %v1570 = vmax.f32 %v1336, 0.0
    %v1571 = vmax.f32 %v1532, 0.0
    %v1572 = vmax.f32 %v1338, 0.0
    %v1573 = vmax.f32 %v1534, 0.0
    %v1574 = vmax.f32 %v1341, 0.0
    %v1575 = vmax.f32 %v1537, 0.0
    %v1576 = vmax.f32 %v1343, 0.0
    %v1577 = vmax.f32 %v1539, 0.0
    %v1578 = vmax.f32 %v1346, 0.0
    %v1579 = vmax.f32 %v1542, 0.0
    %v1580 = vmax.f32 %v1348, 0.0
    %v1581 = vmax.f32 %v1544, 0.0
    %v1582 = vmax.f32 %v1351, 0.0
    %v1583 = vmax.f32 %v1547, 0.0
    %v1584 = vmax.f32 %v1353, 0.0
    %v1585 = vmax.f32 %v1549, 0.0
    %v1586 = vmax.f32 %v1356, 0.0
    %v1587 = vmax.f32 %v1552, 0.0
    %v1588 = vmax.f32 %v1358, 0.0
    %v1589 = vmax.f32 %v1554, 0.0
    %v1590 = vmax.f32 %v1361, 0.0
    %v1591 = vmax.f32 %v1557, 0.0
    %v1592 = vmax.f32 %v1363, 0.0
    %v1593 = vmax.f32 %v1559, 0.0
    %v1594 = vmax.f32 %v1366, 0.0
    %v1595 = vmax.f32 %v1562, 0.0
    %v1596 = vmax.f32 %v1368, 0.0
    %v1597 = vmax.f32 %v1564, 0.0
    %v1598 = vld [vmem:[%s7] sm:$0x3]
    %v1599 = vpack.c.bf16 %v1568, %v1566
    %v1600 = vpack.c.bf16 %v1569, %v1567
    %v1601 = vpack.c.bf16 %v1572, %v1570
    %v1602 = vpack.c.bf16 %v1573, %v1571
    %v1603 = vpack.c.bf16 %v1576, %v1574
    %v1604 = vpack.c.bf16 %v1577, %v1575
    %v1605 = vpack.c.bf16 %v1580, %v1578
    %v1606 = vpack.c.bf16 %v1581, %v1579
    %v1607 = vpack.c.bf16 %v1584, %v1582
    %v1608 = vpack.c.bf16 %v1585, %v1583
    %v1609 = vpack.c.bf16 %v1588, %v1586
    %v1610 = vpack.c.bf16 %v1589, %v1587
    %v1611 = vpack.c.bf16 %v1592, %v1590
    %v1612 = vpack.c.bf16 %v1593, %v1591
    %v1613 = vpack.c.bf16 %v1596, %v1594
    %v1614 = vpack.c.bf16 %v1597, %v1595
    %v1615 = vld [vmem:[#allocation2] sm:$0x1]
    %1617 = vset.pattern.permute.xlu0 0
    %1618 = vperm.xlu0 %1617, %v1615
    %v1619 = vpop.permute.xlu0 %1618
    %v1621 = vperm.slane %v1619, 0
    %1623 = vst [vmem:[#allocation1] ss:$9 sm:$0xff] %v1598
    %v1624 = vld [vmem:[#allocation1] sm:$0xff]
    %v1625 = vld [vmem:[#allocation1 + $0x9] sm:$0xff]
    %1628 = vmatpush.bf16.xpose.msra.mxu0 %v1613
    %1629 = vmatpush.bf16.xpose.msra.mxu0 %v1611
    %1630 = vmatpush.bf16.xpose.msra.mxu0 %v1609
    %1631 = vmatpush.bf16.xpose.msra.mxu0 %v1607
    %1632 = vmatpush.bf16.xpose.msra.mxu0 %v1605
    %1633 = vmatpush.bf16.xpose.msra.mxu0 %v1603
    %1634 = vmatpush.bf16.xpose.msra.mxu0 %v1601
    %1635 = vmatpush.bf16.xpose.msra.mxu0 %v1599
    %1636 = vmatmul.bf16.gmra.mxu0 %v1624
    %v1637 = vpop.f32.mrf.mxu0
    %v1638 = vadd.f32 %v1621, %v1637
    %v1639 = vpop.f32.mrf.mxu0
    %1640 = vdwg.mxu0
    %1641 = vmatpush.bf16.xpose.msra.mxu0 %v1614
    %1642 = vmatpush.bf16.xpose.msra.mxu0 %v1612
    %1643 = vmatpush.bf16.xpose.msra.mxu0 %v1610
    %1644 = vmatpush.bf16.xpose.msra.mxu0 %v1608
    %1645 = vmatpush.bf16.xpose.msra.mxu0 %v1606
    %1646 = vmatpush.bf16.xpose.msra.mxu0 %v1604
    %1647 = vmatpush.bf16.xpose.msra.mxu0 %v1602
    %1648 = vmatpush.bf16.xpose.msra.mxu0 %v1600
    %1649 = vmatmul.bf16.gmra.mxu0 %v1625
    %v1650 = vpop.f32.mrf.mxu0
    %v1651 = vadd.f32 %v1638, %v1650
    %v1652 = vpop.f32.mrf.mxu0
    %1653 = vdwg.mxu0
    %1654 = vst [vmem:[%s9] sm:$0x1] %v1651
    // Predicated region
    $region42: #{qnetwork_forward.1} parent=1 // pred_check
      _
    $region43: #{qnetwork_forward.1} parent=1 // pred_check_branch
      %1656 = sbr.rel (0) target = $region45
    $region44: #{qnetwork_forward.1} parent=1 // pred_region
      _
    $region45: #{qnetwork_forward.1} parent=1 // pred_fallthru
      _
    // Predicated region
    $region46: #{qnetwork_forward.1} parent=1 // pred_check
      _
    $region47: #{qnetwork_forward.1} parent=1 // pred_check_branch
      %1658 = sbr.rel (0) target = $region49
    $region48: #{qnetwork_forward.1} parent=1 // pred_region
      _
    $region49: #{qnetwork_forward.1} parent=1 // pred_fallthru
      _
    %1659 = vsyncpa [#allocation4], 1

</llo_original>
